<compile_context>
chip_gen: v7x
topology: tpu7x:2x2x1
jax: 0.10.0
libtpu: 0.0.40
codegen_flags: <defaults>
</compile_context>

<pallas_src>
import math

import jax
import jax.numpy as jnp
from jax import lax
from jax.experimental import pallas as pl
from jax.experimental.pallas import tpu as pltpu


def _pick_tile(n, cap):
    """Largest multiple of 128 that divides n and is <= cap."""
    best = 128
    t = 128
    while t <= min(n, cap):
        if n % t == 0:
            best = t
        t += 128
    return best


# ---------------------------------------------------------------------------
# Kernel 1: fused q/k/v equalized 1x1 convs + flash attention (online softmax).
#   s[i, j] = sum_e f[e, i] g[e, j];  softmax over i;  att = h @ beta
# Grid: (batch, out-pixel tile j, reduce-pixel tile i); x is streamed twice
# (once per tiling) and f/g/h are recomputed in-kernel (K = C matmuls).
# ---------------------------------------------------------------------------
def _attention_kernel(x_q_ref, x_kv_ref, wfh_ref, bfh_ref, wg_ref, bg_ref,
                      o_ref, g_sc, m_sc, l_sc, acc_sc):
    ki = pl.program_id(2)
    e = o_ref.shape[1]

    @pl.when(ki == 0)
    def _init():
        m_sc[...] = jnp.full(m_sc.shape, -jnp.inf, dtype=m_sc.dtype)
        l_sc[...] = jnp.zeros(l_sc.shape, dtype=l_sc.dtype)
        acc_sc[...] = jnp.zeros(acc_sc.shape, dtype=acc_sc.dtype)
        # Key features g at the out-pixel tile j: computed once, resident across ki.
        xq = x_q_ref[0].astype(jnp.bfloat16)
        g = jnp.dot(wg_ref[...], xq, preferred_element_type=jnp.float32) + bg_ref[...]
        g_sc[...] = g.astype(jnp.bfloat16)

    # Query + value features at the reduce-pixel tile i in one MXU pass (K = C).
    xkv = x_kv_ref[0].astype(jnp.bfloat16)
    fh = jnp.dot(wfh_ref[...], xkv, preferred_element_type=jnp.float32) + bfh_ref[...]
    f = fh[:e].astype(jnp.bfloat16)                              # (E, tkv)
    h = fh[e:].astype(jnp.bfloat16)                              # (E, tkv)

    # (tkv, tq) score tile: contract the embedding dim (axis 0 of both tiles).
    s = lax.dot_general(f, g_sc[...],
                        dimension_numbers=(((0,), (0,)), ((), ())),
                        preferred_element_type=jnp.float32)

    m_prev = m_sc[...]                                           # (1, tq)
    m_new = jnp.maximum(m_prev, jnp.max(s, axis=0, keepdims=True))
    alpha = jnp.exp(m_prev - m_new)                              # (1, tq)
    p = jnp.exp(s - m_new)                                       # (tkv, tq)
    l_sc[...] = alpha * l_sc[...] + jnp.sum(p, axis=0, keepdims=True)
    acc_sc[...] = alpha * acc_sc[...] + jnp.dot(
        h, p.astype(jnp.bfloat16), preferred_element_type=jnp.float32)
    m_sc[...] = m_new

    @pl.when(ki == pl.num_programs(2) - 1)
    def _finalize():
        o_ref[0] = (acc_sc[...] * pl.reciprocal(l_sc[...], approx=True)
                    ).astype(o_ref.dtype)


def _attention(x_flat, w_fh, b_fh, w_g, b_g, emb, tq, tkv):
    B, C, N = x_flat.shape
    cost = pl.CostEstimate(
        flops=int(4 * B * N * N * emb + 6 * B * N * (N // tq + 1) * emb * C),
        transcendentals=int(B * N * N),
        bytes_accessed=int(4 * B * C * N * (N // tq + 1) + 2 * B * emb * N),
    )
    return pl.pallas_call(
        _attention_kernel,
        out_shape=jax.ShapeDtypeStruct((B, emb, N), jnp.bfloat16),
        grid_spec=pltpu.PrefetchScalarGridSpec(
            num_scalar_prefetch=0,
            grid=(B, N // tq, N // tkv),
            in_specs=[
                pl.BlockSpec((1, C, tq), lambda b, qj, ki: (b, 0, qj)),   # x @ out pixels j
                pl.BlockSpec((1, C, tkv), lambda b, qj, ki: (b, 0, ki)),  # x @ reduce pixels i
                pl.BlockSpec((2 * emb, C), lambda b, qj, ki: (0, 0)),     # [Wq; Wv] (scaled)
                pl.BlockSpec((2 * emb, 1), lambda b, qj, ki: (0, 0)),     # [bq; bv]
                pl.BlockSpec((emb, C), lambda b, qj, ki: (0, 0)),         # Wk (scaled)
                pl.BlockSpec((emb, 1), lambda b, qj, ki: (0, 0)),         # bk
            ],
            out_specs=pl.BlockSpec((1, emb, tq), lambda b, qj, ki: (b, 0, qj)),
            scratch_shapes=[
                pltpu.VMEM((emb, tq), jnp.bfloat16),   # cached key features g
                pltpu.VMEM((1, tq), jnp.float32),      # running max m
                pltpu.VMEM((1, tq), jnp.float32),      # running denom l
                pltpu.VMEM((emb, tq), jnp.float32),    # f32 output accumulator
            ],
        ),
        compiler_params=pltpu.CompilerParams(
            dimension_semantics=("parallel", "parallel", "arbitrary")),
        cost_estimate=cost,
    )(x_flat, x_flat, w_fh, b_fh, w_g, b_g)


# ---------------------------------------------------------------------------
# Kernel 2: fused self_att 1x1 conv + SE gate + residual.
#   o = w_sa . att + b_sa (recomputed on the fly);  y = gate * o + x
# ---------------------------------------------------------------------------
def _out_gate_residual_kernel(gate_ref, w_ref, b_ref, att_ref, x_ref, y_ref):
    o = jnp.dot(w_ref[...], att_ref[0],
                preferred_element_type=jnp.float32) + b_ref[...]   # (C, tn) f32
    y_ref[0] = (gate_ref[0] * o + x_ref[0]).astype(y_ref.dtype)


def _out_gate_residual(gate, att, x_flat, w_sa, b_sa, tn):
    B, E, N = att.shape
    C = x_flat.shape[1]
    return pl.pallas_call(
        _out_gate_residual_kernel,
        out_shape=jax.ShapeDtypeStruct((B, C, N), jnp.float32),
        grid_spec=pltpu.PrefetchScalarGridSpec(
            num_scalar_prefetch=0,
            grid=(B, N // tn),
            in_specs=[
                pl.BlockSpec((1, C, 1), lambda b, j: (b, 0, 0)),     # per-batch SE gate
                pl.BlockSpec((C, E), lambda b, j: (0, 0)),           # w_sa (scaled, bf16)
                pl.BlockSpec((C, 1), lambda b, j: (0, 0)),           # b_sa
                pl.BlockSpec((1, E, tn), lambda b, j: (b, 0, j)),    # att (bf16)
                pl.BlockSpec((1, C, tn), lambda b, j: (b, 0, j)),    # x residual
            ],
            out_specs=pl.BlockSpec((1, C, tn), lambda b, j: (b, 0, j)),
        ),
        compiler_params=pltpu.CompilerParams(
            dimension_semantics=("parallel", "parallel")),
    )(gate, w_sa, b_sa, att, x_flat)


# ---------------------------------------------------------------------------
# Full SelfAttention forward
# ---------------------------------------------------------------------------
def self_attention_forward(x, params):
    """x: (B, C, H, W) f32 NCHW; params: raw (unscaled) PyTorch-style weights."""
    B, C, H, W = x.shape
    N = H * W
    E = params["wq"].shape[0]
    assert N % 128 == 0, "this kernel assumes H*W is a multiple of 128"
    assert E % 8 == 0, "embedding_channels must be a multiple of 8 (TPU sublane)"

    # Tile choices (sweep points): 256 pixel tiles fill the 256-wide MXU on
    # v6e/v7x while keeping the (tkv, tq) f32 score tile at 256 KiB (v5e-safe);
    # the memory-bound epilogue kernel uses much wider lane tiles to amortize
    # per-grid-step overhead.  Per-step blocks stay well under scoped-VMEM
    # defaults on every generation (incl. v7x's 64 MiB physical budget).
    tq = tkv = _pick_tile(N, 256)
    tn = _pick_tile(N, 8192)

    x_flat = x.reshape(B, C, N).astype(jnp.float32)

    # Equalized-lr scales: 1 / sqrt(fan_in), fan_in = in_channels * 1 * 1.
    c_in = 1.0 / math.sqrt(C)
    c_emb = 1.0 / math.sqrt(E)

    # Pre-scaled bf16 MXU weights, f32 biases.  [Wq; Wv] fused (one MXU pass per
    # reduce tile); Wk separate (computed once per out tile, cached in VMEM).
    w_fh = jnp.concatenate([params["wq"], params["wv"]], axis=0).reshape(2 * E, C)
    w_fh = (w_fh * c_in).astype(jnp.bfloat16)
    b_fh = jnp.concatenate([params["bq"], params["bv"]]).reshape(2 * E, 1).astype(jnp.float32)
    w_g = (params["wk"].reshape(E, C) * c_in).astype(jnp.bfloat16)
    b_g = params["bk"].reshape(E, 1).astype(jnp.float32)

    # Kernel 1: fused q/k/v convs + flash attention (N x N never materialized).
    att = _attention(x_flat, w_fh, b_fh, w_g, b_g, E, tq, tkv)    # (B, E, N) bf16

    w_sa = (params["w_sa"].reshape(C, E) * c_emb).astype(jnp.bfloat16)
    b_sa = params["b_sa"].astype(jnp.float32)                     # (C,)

    # SE block on pooled features.  adaptive_avg_pool commutes with the 1x1
    # out-conv: pooled(o) = w_sa @ mean_n(att) + b_sa, so the f32 `o` array is
    # never written to HBM and no tiny-problem kernel launch is needed.
    att_mean = jnp.mean(att.astype(jnp.float32), axis=-1)         # (B, E)
    pooled = att_mean @ w_sa.astype(jnp.float32).T + b_sa[None, :]  # (B, C)
    w1 = params["w_se1"].reshape(C, C).astype(jnp.float32) * c_in
    w2 = params["w_se2"].reshape(C, C).astype(jnp.float32) * c_in
    z = pooled @ w1.T + params["b_se1"][None, :].astype(jnp.float32)
    z = jnp.where(z >= 0.0, z,
                  params["prelu_alpha"][None, :].astype(jnp.float32) * z)   # PReLU
    z = z @ w2.T + params["b_se2"][None, :].astype(jnp.float32)
    gate = jax.nn.sigmoid(z).reshape(B, C, 1)                     # (B, C, 1)

    # Kernel 2: recompute o = w_sa . att + b_sa on the fly; y = gate*o + x.
    y = _out_gate_residual(gate, att, x_flat, w_sa,
                           b_sa.reshape(C, 1), tn)                # (B, C, N) f32
    return y.reshape(B, C, H, W)


# ---------------------------------------------------------------------------
# Pure-JAX reference of the PyTorch module (for self-check)
# ---------------------------------------------------------------------------
def reference_forward(x, params, cast_bf16):
    """cast_bf16=True applies the same bf16 matmul-operand rounding as the
    Pallas pipeline (tight check); False is exact f32 module semantics."""
    B, C, H, W = x.shape
    N = H * W
    E = params["wq"].shape[0]
    c_in = 1.0 / math.sqrt(C)
    c_emb = 1.0 / math.sqrt(E)
    hi = lax.Precision.HIGHEST

    def rnd(v):
        return v.astype(jnp.bfloat16).astype(jnp.float32) if cast_bf16 else v

    def conv1x1(inp, w, b, scale):
        wm = rnd(w.reshape(w.shape[0], w.shape[1]) * scale)
        out = jnp.einsum("oc,bcn->bon", wm, rnd(inp), precision=hi)
        return out + b[None, :, None]

    xf = x.reshape(B, C, N)
    f = rnd(conv1x1(xf, params["wq"], params["bq"], c_in))         # (B, E, N)
    g = rnd(conv1x1(xf, params["wk"], params["bk"], c_in))
    h = rnd(conv1x1(xf, params["wv"], params["bv"], c_in))

    s = jnp.einsum("bei,bej->bij", f, g, precision=hi)             # (B, N, N)
    beta = jax.nn.softmax(s, axis=1)                               # softmax over i (dim=1)
    v = rnd(jnp.einsum("bei,bij->bej", h, beta, precision=hi))     # (B, E, N)
    o = conv1x1(v, params["w_sa"], params["b_sa"], c_emb)          # (B, C, N) f32

    pooled = jnp.mean(o, axis=-1)                                  # (B, C)
    w1 = params["w_se1"].reshape(C, C) * c_in
    w2 = params["w_se2"].reshape(C, C) * c_in
    z = jnp.dot(pooled, w1.T, precision=hi) + params["b_se1"][None, :]
    z = jnp.where(z >= 0, z, params["prelu_alpha"][None, :] * z)
    z = jnp.dot(z, w2.T, precision=hi) + params["b_se2"][None, :]
    gate = jax.nn.sigmoid(z)                                       # (B, C)

    y = gate[:, :, None] * o + xf
    return y.reshape(B, C, H, W)


# ---------------------------------------------------------------------------
# Demo / self-check
# ---------------------------------------------------------------------------
if __name__ == "__main__":
    key = jax.random.PRNGKey(0)
    ks = jax.random.split(key, 14)

    B, C, E, H, W = 2, 4, 8, 16, 16     # in_planes=4, embedding_channels=8, N=256

    x = jax.random.normal(ks[0], (B, C, H, W), dtype=jnp.float32)
    params = {
        "wq": jax.random.normal(ks[1], (E, C, 1, 1), dtype=jnp.float32),
        "bq": jax.random.normal(ks[2], (E,), dtype=jnp.float32),
        "wk": jax.random.normal(ks[3], (E, C, 1, 1), dtype=jnp.float32),
        "bk": jax.random.normal(ks[4], (E,), dtype=jnp.float32),
        "wv": jax.random.normal(ks[5], (E, C, 1, 1), dtype=jnp.float32),
        "bv": jax.random.normal(ks[6], (E,), dtype=jnp.float32),
        "w_sa": jax.random.normal(ks[7], (C, E, 1, 1), dtype=jnp.float32),
        "b_sa": jax.random.normal(ks[8], (C,), dtype=jnp.float32),
        "w_se1": jax.random.normal(ks[9], (C, C, 1, 1), dtype=jnp.float32),
        "b_se1": jax.random.normal(ks[10], (C,), dtype=jnp.float32),
        "w_se2": jax.random.normal(ks[11], (C, C, 1, 1), dtype=jnp.float32),
        "b_se2": jax.random.normal(ks[12], (C,), dtype=jnp.float32),
        # nn.PReLU(in_planes) weight (randomized to exercise the per-channel path).
        "prelu_alpha": jax.random.uniform(ks[13], (C,), dtype=jnp.float32,
                                          minval=0.05, maxval=0.5),
    }

    out = jax.jit(self_attention_forward)(x, params)
    out = jax.block_until_ready(out)

    ref_matched = reference_forward(x, params, cast_bf16=True)   # matched operand precision
    ref_exact = reference_forward(x, params, cast_bf16=False)    # exact f32 semantics

    assert out.shape == (B, C, H, W), out.shape
    assert bool(jnp.all(jnp.isfinite(out)))
    # Tight check vs. a reference using the same bf16 matmul-operand rounding.
    assert jnp.allclose(out, ref_matched, atol=2e-2, rtol=2e-2), (
        float(jnp.max(jnp.abs(out - ref_matched))))
    # Loose sanity check vs. pure-f32 module semantics (covers bf16 rounding).
    assert jnp.allclose(out, ref_exact, atol=0.25, rtol=0.25), (
        float(jnp.max(jnp.abs(out - ref_exact))))
    print("KERNEL_OK")
</pallas_src>

<mosaic_0001>
module attributes {stable_mosaic.version = 11 : i64} {
  func.func @_attention_kernel(%arg0: i32, %arg1: i32, %arg2: i32, %arg3: memref<1x4x256xf32, #tpu.memory_space<vmem>>, %arg4: memref<1x4x256xf32, #tpu.memory_space<vmem>>, %arg5: memref<16x4xbf16, #tpu.memory_space<vmem>>, %arg6: memref<16x1xf32, #tpu.memory_space<vmem>>, %arg7: memref<8x4xbf16, #tpu.memory_space<vmem>>, %arg8: memref<8x1xf32, #tpu.memory_space<vmem>>, %arg9: memref<1x8x256xbf16, #tpu.memory_space<vmem>>, %arg10: memref<8x256xbf16, #tpu.memory_space<vmem>>, %arg11: memref<1x256xf32, #tpu.memory_space<vmem>>, %arg12: memref<1x256xf32, #tpu.memory_space<vmem>>, %arg13: memref<8x256xf32, #tpu.memory_space<vmem>>) attributes {dimension_semantics = [#tpu.dimension_semantics<parallel>, #tpu.dimension_semantics<parallel>, #tpu.dimension_semantics<arbitrary>], iteration_bounds = array<i64: 2, 1, 1>, scalar_prefetch = 0 : i64, scratch_operands = 4 : i64, tpu.core_type = #tpu.core_type<tc>, window_params = [{transform_indices = @transform_0, window_bounds = array<i64: 1, 4, 256>}, {transform_indices = @transform_1, window_bounds = array<i64: 1, 4, 256>}, {pipeline_mode = #tpu.pipeline_mode<synchronous>, transform_indices = @transform_2, window_bounds = array<i64: 16, 4>}, {pipeline_mode = #tpu.pipeline_mode<synchronous>, transform_indices = @transform_3, window_bounds = array<i64: 16, 1>}, {pipeline_mode = #tpu.pipeline_mode<synchronous>, transform_indices = @transform_4, window_bounds = array<i64: 8, 4>}, {pipeline_mode = #tpu.pipeline_mode<synchronous>, transform_indices = @transform_5, window_bounds = array<i64: 8, 1>}, {transform_indices = @transform_6, window_bounds = array<i64: 1, 8, 256>}]} {
    %c0_i32 = arith.constant 0 : i32
    %0 = arith.cmpi eq, %arg2, %c0_i32 : i32
    %1 = arith.extui %0 : i1 to i32
    %c0_i32_0 = arith.constant 0 : i32
    %2 = arith.cmpi ne, %1, %c0_i32_0 : i32
    scf.if %2 {
      %cst_27 = arith.constant 0xFF800000 : f32
      %43 = vector.broadcast %cst_27 : f32 to vector<1x256xf32>
      %c0_28 = arith.constant 0 : index
      %c0_29 = arith.constant 0 : index
      %44 = vector.load %arg11[%c0_28, %c0_29] : memref<1x256xf32, #tpu.memory_space<vmem>>, vector<1x256xf32>
      tpu.vector_store %arg11[%c0_28, %c0_29], %43 {strides = array<i32>} : memref<1x256xf32, #tpu.memory_space<vmem>>, vector<1x256xf32>,
      %cst_30 = arith.constant 0.000000e+00 : f32
      %45 = vector.broadcast %cst_30 : f32 to vector<1x256xf32>
      %c0_31 = arith.constant 0 : index
      %c0_32 = arith.constant 0 : index
      %46 = vector.load %arg12[%c0_31, %c0_32] : memref<1x256xf32, #tpu.memory_space<vmem>>, vector<1x256xf32>
      tpu.vector_store %arg12[%c0_31, %c0_32], %45 {strides = array<i32>} : memref<1x256xf32, #tpu.memory_space<vmem>>, vector<1x256xf32>,
      %cst_33 = arith.constant 0.000000e+00 : f32
      %47 = vector.broadcast %cst_33 : f32 to vector<8x256xf32>
      %c0_34 = arith.constant 0 : index
      %c0_35 = arith.constant 0 : index
      %48 = vector.load %arg13[%c0_34, %c0_35] : memref<8x256xf32, #tpu.memory_space<vmem>>, vector<8x256xf32>
      tpu.vector_store %arg13[%c0_34, %c0_35], %47 {strides = array<i32>} : memref<8x256xf32, #tpu.memory_space<vmem>>, vector<8x256xf32>,
      %c0_36 = arith.constant 0 : index
      %c0_37 = arith.constant 0 : index
      %c0_38 = arith.constant 0 : index
      %49 = vector.load %arg3[%c0_36, %c0_37, %c0_38] : memref<1x4x256xf32, #tpu.memory_space<vmem>>, vector<1x4x256xf32>
      %50 = vector.shape_cast %49 : vector<1x4x256xf32> to vector<4x256xf32>
      %51 = arith.truncf %50 : vector<4x256xf32> to vector<4x256xbf16>
      %c0_39 = arith.constant 0 : index
      %c0_40 = arith.constant 0 : index
      %52 = vector.load %arg7[%c0_39, %c0_40] : memref<8x4xbf16, #tpu.memory_space<vmem>>, vector<8x4xbf16>
      %cst_41 = arith.constant dense<0.000000e+00> : vector<8x256xf32>
      %53 = tpu.matmul %52, %51, %cst_41 {dimension_numbers = #tpu.dot_dimension_numbers<[1], [0], [0], [1], [0, 0, 1, 1], [], []>} : vector<8x4xbf16>, vector<4x256xbf16>, vector<8x256xf32> -> vector<8x256xf32>
      %c0_42 = arith.constant 0 : index
      %c0_43 = arith.constant 0 : index
      %54 = vector.load %arg8[%c0_42, %c0_43] : memref<8x1xf32, #tpu.memory_space<vmem>>, vector<8x1xf32>
      %55 = vector.broadcast %54 : vector<8x1xf32> to vector<8x256xf32>
      %56 = arith.addf %53, %55 : vector<8x256xf32>
      %57 = arith.truncf %56 : vector<8x256xf32> to vector<8x256xbf16>
      %c0_44 = arith.constant 0 : index
      %c0_45 = arith.constant 0 : index
      %58 = vector.load %arg10[%c0_44, %c0_45] : memref<8x256xbf16, #tpu.memory_space<vmem>>, vector<8x256xbf16>
      tpu.vector_store %arg10[%c0_44, %c0_45], %57 {strides = array<i32>} : memref<8x256xbf16, #tpu.memory_space<vmem>>, vector<8x256xbf16>,
    } else {
    }
    %c0 = arith.constant 0 : index
    %c0_1 = arith.constant 0 : index
    %c0_2 = arith.constant 0 : index
    %3 = vector.load %arg4[%c0, %c0_1, %c0_2] : memref<1x4x256xf32, #tpu.memory_space<vmem>>, vector<1x4x256xf32>
    %4 = vector.shape_cast %3 : vector<1x4x256xf32> to vector<4x256xf32>
    %5 = arith.truncf %4 : vector<4x256xf32> to vector<4x256xbf16>
    %c0_3 = arith.constant 0 : index
    %c0_4 = arith.constant 0 : index
    %6 = vector.load %arg5[%c0_3, %c0_4] : memref<16x4xbf16, #tpu.memory_space<vmem>>, vector<16x4xbf16>
    %cst = arith.constant dense<0.000000e+00> : vector<16x256xf32>
    %7 = tpu.matmul %6, %5, %cst {dimension_numbers = #tpu.dot_dimension_numbers<[1], [0], [0], [1], [0, 0, 1, 1], [], []>} : vector<16x4xbf16>, vector<4x256xbf16>, vector<16x256xf32> -> vector<16x256xf32>
    %c0_5 = arith.constant 0 : index
    %c0_6 = arith.constant 0 : index
    %8 = vector.load %arg6[%c0_5, %c0_6] : memref<16x1xf32, #tpu.memory_space<vmem>>, vector<16x1xf32>
    %9 = vector.broadcast %8 : vector<16x1xf32> to vector<16x256xf32>
    %10 = arith.addf %7, %9 : vector<16x256xf32>
    %11 = vector.extract_strided_slice %10 {offsets = [0, 0], sizes = [8, 256], strides = [1, 1]} : vector<16x256xf32> to vector<8x256xf32>
    %12 = arith.truncf %11 : vector<8x256xf32> to vector<8x256xbf16>
    %13 = vector.extract_strided_slice %10 {offsets = [8, 0], sizes = [8, 256], strides = [1, 1]} : vector<16x256xf32> to vector<8x256xf32>
    %14 = arith.truncf %13 : vector<8x256xf32> to vector<8x256xbf16>
    %c0_7 = arith.constant 0 : index
    %c0_8 = arith.constant 0 : index
    %15 = vector.load %arg10[%c0_7, %c0_8] : memref<8x256xbf16, #tpu.memory_space<vmem>>, vector<8x256xbf16>
    %cst_9 = arith.constant dense<0.000000e+00> : vector<256x256xf32>
    %16 = tpu.matmul %12, %15, %cst_9 {dimension_numbers = #tpu.dot_dimension_numbers<[0], [0], [1], [1], [0, 1, 1, 1], [], []>} : vector<8x256xbf16>, vector<8x256xbf16>, vector<256x256xf32> -> vector<256x256xf32>
    %c0_10 = arith.constant 0 : index
    %c0_11 = arith.constant 0 : index
    %17 = vector.load %arg11[%c0_10, %c0_11] : memref<1x256xf32, #tpu.memory_space<vmem>>, vector<1x256xf32>
    %cst_12 = arith.constant dense<0xFF800000> : vector<256xf32>
    %18 = vector.multi_reduction <maximumf>, %16, %cst_12 [0] : vector<256x256xf32> to vector<256xf32>
    %19 = vector.shape_cast %18 : vector<256xf32> to vector<1x256xf32>
    %20 = arith.maximumf %17, %19 : vector<1x256xf32>
    %21 = arith.subf %17, %20 : vector<1x256xf32>
    %22 = math.exp %21 : vector<1x256xf32>
    %23 = vector.broadcast %20 : vector<1x256xf32> to vector<256x256xf32>
    %24 = arith.subf %16, %23 : vector<256x256xf32>
    %25 = math.exp %24 : vector<256x256xf32>
    %c0_13 = arith.constant 0 : index
    %c0_14 = arith.constant 0 : index
    %26 = vector.load %arg12[%c0_13, %c0_14] : memref<1x256xf32, #tpu.memory_space<vmem>>, vector<1x256xf32>
    %27 = arith.mulf %22, %26 : vector<1x256xf32>
    %cst_15 = arith.constant dense<0.000000e+00> : vector<256xf32>
    %28 = vector.multi_reduction <add>, %25, %cst_15 [0] : vector<256x256xf32> to vector<256xf32>
    %29 = vector.shape_cast %28 : vector<256xf32> to vector<1x256xf32>
    %30 = arith.addf %27, %29 : vector<1x256xf32>
    %c0_16 = arith.constant 0 : index
    %c0_17 = arith.constant 0 : index
    %31 = vector.load %arg12[%c0_16, %c0_17] : memref<1x256xf32, #tpu.memory_space<vmem>>, vector<1x256xf32>
    tpu.vector_store %arg12[%c0_16, %c0_17], %30 {strides = array<i32>} : memref<1x256xf32, #tpu.memory_space<vmem>>, vector<1x256xf32>,
    %c0_18 = arith.constant 0 : index
    %c0_19 = arith.constant 0 : index
    %32 = vector.load %arg13[%c0_18, %c0_19] : memref<8x256xf32, #tpu.memory_space<vmem>>, vector<8x256xf32>
    %33 = vector.broadcast %22 : vector<1x256xf32> to vector<8x256xf32>
    %34 = arith.mulf %33, %32 : vector<8x256xf32>
    %35 = arith.truncf %25 : vector<256x256xf32> to vector<256x256xbf16>
    %cst_20 = arith.constant dense<0.000000e+00> : vector<8x256xf32>
    %36 = tpu.matmul %14, %35, %cst_20 {dimension_numbers = #tpu.dot_dimension_numbers<[1], [0], [0], [1], [0, 0, 1, 1], [], []>} : vector<8x256xbf16>, vector<256x256xbf16>, vector<8x256xf32> -> vector<8x256xf32>
    %37 = arith.addf %34, %36 : vector<8x256xf32>
    %c0_21 = arith.constant 0 : index
    %c0_22 = arith.constant 0 : index
    %38 = vector.load %arg13[%c0_21, %c0_22] : memref<8x256xf32, #tpu.memory_space<vmem>>, vector<8x256xf32>
    tpu.vector_store %arg13[%c0_21, %c0_22], %37 {strides = array<i32>} : memref<8x256xf32, #tpu.memory_space<vmem>>, vector<8x256xf32>,
    %c0_23 = arith.constant 0 : index
    %c0_24 = arith.constant 0 : index
    %39 = vector.load %arg11[%c0_23, %c0_24] : memref<1x256xf32, #tpu.memory_space<vmem>>, vector<1x256xf32>
    tpu.vector_store %arg11[%c0_23, %c0_24], %20 {strides = array<i32>} : memref<1x256xf32, #tpu.memory_space<vmem>>, vector<1x256xf32>,
    %c0_i32_25 = arith.constant 0 : i32
    %40 = arith.cmpi eq, %arg2, %c0_i32_25 : i32
    %41 = arith.extui %40 : i1 to i32
    %c0_i32_26 = arith.constant 0 : i32
    %42 = arith.cmpi ne, %41, %c0_i32_26 : i32
    scf.if %42 {
      %c0_27 = arith.constant 0 : index
      %c0_28 = arith.constant 0 : index
      %43 = vector.load %arg13[%c0_27, %c0_28] : memref<8x256xf32, #tpu.memory_space<vmem>>, vector<8x256xf32>
      %c0_29 = arith.constant 0 : index
      %c0_30 = arith.constant 0 : index
      %44 = vector.load %arg12[%c0_29, %c0_30] : memref<1x256xf32, #tpu.memory_space<vmem>>, vector<1x256xf32>
      %45 = tpu.reciprocal %44 {approx = true} : vector<1x256xf32> -> vector<1x256xf32>
      %46 = vector.broadcast %45 : vector<1x256xf32> to vector<8x256xf32>
      %47 = arith.mulf %43, %46 : vector<8x256xf32>
      %48 = arith.truncf %47 : vector<8x256xf32> to vector<8x256xbf16>
      %c0_31 = arith.constant 0 : index
      %c0_32 = arith.constant 0 : index
      %c0_33 = arith.constant 0 : index
      %49 = vector.load %arg9[%c0_31, %c0_32, %c0_33] : memref<1x8x256xbf16, #tpu.memory_space<vmem>>, vector<1x8x256xbf16>
      %50 = vector.shape_cast %49 : vector<1x8x256xbf16> to vector<8x256xbf16>
      %51 = vector.shape_cast %48 : vector<8x256xbf16> to vector<1x8x256xbf16>
      tpu.vector_store %arg9[%c0_31, %c0_32, %c0_33], %51 {strides = array<i32>} : memref<1x8x256xbf16, #tpu.memory_space<vmem>>, vector<1x8x256xbf16>,
    } else {
    }
    return
  }
  func.func @transform_0(%arg0: i32, %arg1: i32, %arg2: i32) -> (i32, i32, i32) {
    %c0_i32 = arith.constant 0 : i32
    %c0_i32_0 = arith.constant 0 : i32
    return %arg0, %c0_i32, %arg1 : i32, i32, i32
  }
  func.func @transform_1(%arg0: i32, %arg1: i32, %arg2: i32) -> (i32, i32, i32) {
    %c0_i32 = arith.constant 0 : i32
    %c0_i32_0 = arith.constant 0 : i32
    return %arg0, %c0_i32, %arg2 : i32, i32, i32
  }
  func.func @transform_2(%arg0: i32, %arg1: i32, %arg2: i32) -> (i32, i32) {
    %c0_i32 = arith.constant 0 : i32
    %c0_i32_0 = arith.constant 0 : i32
    %c0_i32_1 = arith.constant 0 : i32
    return %c0_i32, %c0_i32_0 : i32, i32
  }
  func.func @transform_3(%arg0: i32, %arg1: i32, %arg2: i32) -> (i32, i32) {
    %c0_i32 = arith.constant 0 : i32
    %c0_i32_0 = arith.constant 0 : i32
    %c0_i32_1 = arith.constant 0 : i32
    return %c0_i32, %c0_i32_0 : i32, i32
  }
  func.func @transform_4(%arg0: i32, %arg1: i32, %arg2: i32) -> (i32, i32) {
    %c0_i32 = arith.constant 0 : i32
    %c0_i32_0 = arith.constant 0 : i32
    %c0_i32_1 = arith.constant 0 : i32
    return %c0_i32, %c0_i32_0 : i32, i32
  }
  func.func @transform_5(%arg0: i32, %arg1: i32, %arg2: i32) -> (i32, i32) {
    %c0_i32 = arith.constant 0 : i32
    %c0_i32_0 = arith.constant 0 : i32
    %c0_i32_1 = arith.constant 0 : i32
    return %c0_i32, %c0_i32_0 : i32, i32
  }
  func.func @transform_6(%arg0: i32, %arg1: i32, %arg2: i32) -> (i32, i32, i32) {
    %c0_i32 = arith.constant 0 : i32
    %c0_i32_0 = arith.constant 0 : i32
    return %arg0, %c0_i32, %arg1 : i32, i32, i32
  }
}

module attributes {stable_mosaic.version = 11 : i64} {
  func.func @_out_gate_residual_kernel(%arg0: i32, %arg1: i32, %arg2: memref<1x4x1xf32, #tpu.memory_space<vmem>>, %arg3: memref<4x8xbf16, #tpu.memory_space<vmem>>, %arg4: memref<4x1xf32, #tpu.memory_space<vmem>>, %arg5: memref<1x8x256xbf16, #tpu.memory_space<vmem>>, %arg6: memref<1x4x256xf32, #tpu.memory_space<vmem>>, %arg7: memref<1x4x256xf32, #tpu.memory_space<vmem>>) attributes {dimension_semantics = [#tpu.dimension_semantics<parallel>, #tpu.dimension_semantics<parallel>], iteration_bounds = array<i64: 2, 1>, scalar_prefetch = 0 : i64, scratch_operands = 0 : i64, tpu.core_type = #tpu.core_type<tc>, window_params = [{transform_indices = @transform_0, window_bounds = array<i64: 1, 4, 1>}, {pipeline_mode = #tpu.pipeline_mode<synchronous>, transform_indices = @transform_1, window_bounds = array<i64: 4, 8>}, {pipeline_mode = #tpu.pipeline_mode<synchronous>, transform_indices = @transform_2, window_bounds = array<i64: 4, 1>}, {transform_indices = @transform_3, window_bounds = array<i64: 1, 8, 256>}, {transform_indices = @transform_4, window_bounds = array<i64: 1, 4, 256>}, {transform_indices = @transform_5, window_bounds = array<i64: 1, 4, 256>}]} {
    %c0 = arith.constant 0 : index
    %c0_0 = arith.constant 0 : index
    %0 = vector.load %arg3[%c0, %c0_0] : memref<4x8xbf16, #tpu.memory_space<vmem>>, vector<4x8xbf16>
    %c0_1 = arith.constant 0 : index
    %c0_2 = arith.constant 0 : index
    %c0_3 = arith.constant 0 : index
    %1 = vector.load %arg5[%c0_1, %c0_2, %c0_3] : memref<1x8x256xbf16, #tpu.memory_space<vmem>>, vector<1x8x256xbf16>
    %2 = vector.shape_cast %1 : vector<1x8x256xbf16> to vector<8x256xbf16>
    %cst = arith.constant dense<0.000000e+00> : vector<4x256xf32>
    %3 = tpu.matmul %0, %2, %cst {dimension_numbers = #tpu.dot_dimension_numbers<[1], [0], [0], [1], [0, 0, 1, 1], [], []>} : vector<4x8xbf16>, vector<8x256xbf16>, vector<4x256xf32> -> vector<4x256xf32>
    %c0_4 = arith.constant 0 : index
    %c0_5 = arith.constant 0 : index
    %4 = vector.load %arg4[%c0_4, %c0_5] : memref<4x1xf32, #tpu.memory_space<vmem>>, vector<4x1xf32>
    %5 = vector.broadcast %4 : vector<4x1xf32> to vector<4x256xf32>
    %6 = arith.addf %3, %5 : vector<4x256xf32>
    %c0_6 = arith.constant 0 : index
    %c0_7 = arith.constant 0 : index
    %c0_8 = arith.constant 0 : index
    %7 = vector.load %arg2[%c0_6, %c0_7, %c0_8] : memref<1x4x1xf32, #tpu.memory_space<vmem>>, vector<1x4x1xf32>
    %8 = vector.shape_cast %7 : vector<1x4x1xf32> to vector<4x1xf32>
    %9 = vector.broadcast %8 : vector<4x1xf32> to vector<4x256xf32>
    %10 = arith.mulf %9, %6 : vector<4x256xf32>
    %c0_9 = arith.constant 0 : index
    %c0_10 = arith.constant 0 : index
    %c0_11 = arith.constant 0 : index
    %11 = vector.load %arg6[%c0_9, %c0_10, %c0_11] : memref<1x4x256xf32, #tpu.memory_space<vmem>>, vector<1x4x256xf32>
    %12 = vector.shape_cast %11 : vector<1x4x256xf32> to vector<4x256xf32>
    %13 = arith.addf %10, %12 : vector<4x256xf32>
    %c0_12 = arith.constant 0 : index
    %c0_13 = arith.constant 0 : index
    %c0_14 = arith.constant 0 : index
    %14 = vector.load %arg7[%c0_12, %c0_13, %c0_14] : memref<1x4x256xf32, #tpu.memory_space<vmem>>, vector<1x4x256xf32>
    %15 = vector.shape_cast %14 : vector<1x4x256xf32> to vector<4x256xf32>
    %16 = vector.shape_cast %13 : vector<4x256xf32> to vector<1x4x256xf32>
    tpu.vector_store %arg7[%c0_12, %c0_13, %c0_14], %16 {strides = array<i32>} : memref<1x4x256xf32, #tpu.memory_space<vmem>>, vector<1x4x256xf32>,
    return
  }
  func.func @transform_0(%arg0: i32, %arg1: i32) -> (i32, i32, i32) {
    %c0_i32 = arith.constant 0 : i32
    %c0_i32_0 = arith.constant 0 : i32
    %c0_i32_1 = arith.constant 0 : i32
    return %arg0, %c0_i32, %c0_i32_0 : i32, i32, i32
  }
  func.func @transform_1(%arg0: i32, %arg1: i32) -> (i32, i32) {
    %c0_i32 = arith.constant 0 : i32
    %c0_i32_0 = arith.constant 0 : i32
    %c0_i32_1 = arith.constant 0 : i32
    return %c0_i32, %c0_i32_0 : i32, i32
  }
  func.func @transform_2(%arg0: i32, %arg1: i32) -> (i32, i32) {
    %c0_i32 = arith.constant 0 : i32
    %c0_i32_0 = arith.constant 0 : i32
    %c0_i32_1 = arith.constant 0 : i32
    return %c0_i32, %c0_i32_0 : i32, i32
  }
  func.func @transform_3(%arg0: i32, %arg1: i32) -> (i32, i32, i32) {
    %c0_i32 = arith.constant 0 : i32
    %c0_i32_0 = arith.constant 0 : i32
    return %arg0, %c0_i32, %arg1 : i32, i32, i32
  }
  func.func @transform_4(%arg0: i32, %arg1: i32) -> (i32, i32, i32) {
    %c0_i32 = arith.constant 0 : i32
    %c0_i32_0 = arith.constant 0 : i32
    return %arg0, %c0_i32, %arg1 : i32, i32, i32
  }
  func.func @transform_5(%arg0: i32, %arg1: i32) -> (i32, i32, i32) {
    %c0_i32 = arith.constant 0 : i32
    %c0_i32_0 = arith.constant 0 : i32
    return %arg0, %c0_i32, %arg1 : i32, i32, i32
  }
}

</mosaic_0001>

<llo_original>
// kernel: self_attention_forward.3
$region0: #{self_attention_forward.3}
  #allocation0 [shape = 'u32[]', space=smem, size = 0x4, offset = 0x4, fixed_abs, tag = 'smem constant byte address 0x4 - core index']
  #allocation1 [shape = 'u32[144,128]{1,0:T(1,128)}', space=vmem, size = 0x12000, scoped, tag = 'internal scratch']
  %s0 = inlined_call_operand.vmem [shape: f32[2,4,1], index: 0, kind: input, shape index: {}]
  %s1 = inlined_call_operand.vmem [shape: bf16[4,8], index: 1, kind: input, shape index: {}]
  %s2 = inlined_call_operand.vmem [shape: f32[4,1], index: 2, kind: input, shape index: {}]
  %s3 = inlined_call_operand.vmem [shape: bf16[2,8,256], index: 3, kind: input, shape index: {}]
  %s4 = inlined_call_operand.vmem [shape: f32[2,4,256], index: 4, kind: input, shape index: {}]
  %s5 = inlined_call_operand.vmem [shape: f32[2,4,256], index: 5, kind: output, shape index: {}]
  %s6 = sld [smem:[#allocation0]]
  $region53: #{self_attention_forward.3} parent=0
    _
  %s8 = ssub.s32 1, %s6
  %s9 = scalar_select 0, %s8, %s6
  loop: start=0, step=1, limit=4
  $region2: #{self_attention_forward.3} parent=0 // loop_pre_header
    _
  $region3: #{self_attention_forward.3} parent=0 // loop_header
    %s11 = sphi 0, %s15
    %p12 = scmp.ge.s32.totalorder %s11, 4
    %s18 = sphi 0, %s30
    %s19 = sphi 0, %s26
    %s20 = sphi 0, %s18
    %s21 = sphi 0, %s19
    %s22 = sphi 0, %s20
    %s23 = sphi 0, %s21
    %s33 = sphi 0, %s35
    %s36 = sphi 0, %s33
    %s37 = sphi 0, %s36
    %s53 = sphi 0, %s37
    %s57 = sphi 0, %s57
    %s59 = sphi 0, %s57
    %s60 = sphi 0, %s59
    %s74 = sphi 0, %s60
    %s78 = sphi 0, %s78
    %s80 = sphi 0, %s78
    %s81 = sphi 0, %s80
    %s95 = sphi 0, %s81
    %s103 = sphi 0, %s105
    %s106 = sphi 0, %s103
    %s107 = sphi 0, %s106
    %s123 = sphi 0, %s107
    %s131 = sphi 0, %s133
    %s134 = sphi 0, %s131
    %s135 = sphi 0, %s134
    %s151 = sphi 0, %s135
    %s159 = sphi 0, %s161
    %s162 = sphi 0, %s159
    %s163 = sphi 0, %s162
    %s179 = sphi 0, %s163
  $region4: #{self_attention_forward.3} parent=0 // loop_header_branch
    %14 = sbr.rel (%p12) target = $region8
  $region5: #{self_attention_forward.3} parent=0 // loop_body
    %s16 = ssub.s32 %s11, 1
    %s17 = ssub.s32 %s11, 2
    %s24 = sadd.s32 1, %s19
    %p25 = scmp.ge.s32.totalorder %s24, 1
    %s26 = scalar_select %p25, 0, %s24
    %s27 = sadd.s32 1, %s18
    %s28 = scalar_select %p25, %s27, %s18
    %p29 = scmp.ge.s32.totalorder %s28, 2
    %s30 = scalar_select %p29, 0, %s28
    %s31 = ssub.s32 %s18, %s30
    %p32 = scmp.eq.s32.totalorder %s31, 0
    %s34 = sadd.s32 %s33, 1
    %s35 = scalar_select %p32, %s33, %s34
    %p38 = pneg %p32
    %p39 = scmp.eq.s32.totalorder %s11, 1
    %p40 = por %p38, %p39
    %p41 = scmp.ne.s32.totalorder %s33, %s36
    %p42 = scmp.eq.s32.totalorder %s11, 0
    %p43 = por %p41, %p42
    %p44 = scmp.ne.s32.totalorder %s33, %s36
    %p45 = scmp.eq.s32.totalorder %s16, 1
    %p46 = por %p44, %p45
    %p47 = scmp.ne.s32.totalorder %s36, %s37
    %p48 = scmp.eq.s32.totalorder %s16, 0
    %p49 = por %p47, %p48
    %p50 = scmp.ne.s32.totalorder %s36, %s37
    %p51 = scmp.eq.s32.totalorder %s17, 1
    %p52 = por %p50, %p51
    %p54 = scmp.ne.s32.totalorder %s37, %s53
    %p55 = scmp.eq.s32.totalorder %s17, 0
    %p56 = por %p54, %p55
    %s58 = sadd.s32 %s57, 1
    %p61 = scmp.eq.s32.totalorder %s11, 1
    %p62 = scmp.ne.s32.totalorder %s57, %s59
    %p63 = scmp.eq.s32.totalorder %s11, 0
    %p64 = por %p62, %p63
    %p65 = scmp.ne.s32.totalorder %s57, %s59
    %p66 = scmp.eq.s32.totalorder %s16, 1
    %p67 = por %p65, %p66
    %p68 = scmp.ne.s32.totalorder %s59, %s60
    %p69 = scmp.eq.s32.totalorder %s16, 0
    %p70 = por %p68, %p69
    %p71 = scmp.ne.s32.totalorder %s59, %s60
    %p72 = scmp.eq.s32.totalorder %s17, 1
    %p73 = por %p71, %p72
    %p75 = scmp.ne.s32.totalorder %s60, %s74
    %p76 = scmp.eq.s32.totalorder %s17, 0
    %p77 = por %p75, %p76
    %s79 = sadd.s32 %s78, 1
    %p82 = scmp.eq.s32.totalorder %s11, 1
    %p83 = scmp.ne.s32.totalorder %s78, %s80
    %p84 = scmp.eq.s32.totalorder %s11, 0
    %p85 = por %p83, %p84
    %p86 = scmp.ne.s32.totalorder %s78, %s80
    %p87 = scmp.eq.s32.totalorder %s16, 1
    %p88 = por %p86, %p87
    %p89 = scmp.ne.s32.totalorder %s80, %s81
    %p90 = scmp.eq.s32.totalorder %s16, 0
    %p91 = por %p89, %p90
    %p92 = scmp.ne.s32.totalorder %s80, %s81
    %p93 = scmp.eq.s32.totalorder %s17, 1
    %p94 = por %p92, %p93
    %p96 = scmp.ne.s32.totalorder %s81, %s95
    %p97 = scmp.eq.s32.totalorder %s17, 0
    %p98 = por %p96, %p97
    %s99 = ssub.s32 %s18, %s30
    %s100 = ssub.s32 %s19, %s26
    %s101 = sor.u32 %s99, %s100
    %p102 = scmp.eq.s32.totalorder %s101, 0
    %s104 = sadd.s32 %s103, 1
    %s105 = scalar_select %p102, %s103, %s104
    %p108 = pneg %p102
    %p109 = scmp.eq.s32.totalorder %s11, 1
    %p110 = por %p108, %p109
    %p111 = scmp.ne.s32.totalorder %s103, %s106
    %p112 = scmp.eq.s32.totalorder %s11, 0
    %p113 = por %p111, %p112
    %p114 = scmp.ne.s32.totalorder %s103, %s106
    %p115 = scmp.eq.s32.totalorder %s16, 1
    %p116 = por %p114, %p115
    %p117 = scmp.ne.s32.totalorder %s106, %s107
    %p118 = scmp.eq.s32.totalorder %s16, 0
    %p119 = por %p117, %p118
    %p120 = scmp.ne.s32.totalorder %s106, %s107
    %p121 = scmp.eq.s32.totalorder %s17, 1
    %p122 = por %p120, %p121
    %p124 = scmp.ne.s32.totalorder %s107, %s123
    %p125 = scmp.eq.s32.totalorder %s17, 0
    %p126 = por %p124, %p125
    %s127 = ssub.s32 %s18, %s30
    %s128 = ssub.s32 %s19, %s26
    %s129 = sor.u32 %s127, %s128
    %p130 = scmp.eq.s32.totalorder %s129, 0
    %s132 = sadd.s32 %s131, 1
    %s133 = scalar_select %p130, %s131, %s132
    %p136 = pneg %p130
    %p137 = scmp.eq.s32.totalorder %s11, 1
    %p138 = por %p136, %p137
    %p139 = scmp.ne.s32.totalorder %s131, %s134
    %p140 = scmp.eq.s32.totalorder %s11, 0
    %p141 = por %p139, %p140
    %p142 = scmp.ne.s32.totalorder %s131, %s134
    %p143 = scmp.eq.s32.totalorder %s16, 1
    %p144 = por %p142, %p143
    %p145 = scmp.ne.s32.totalorder %s134, %s135
    %p146 = scmp.eq.s32.totalorder %s16, 0
    %p147 = por %p145, %p146
    %p148 = scmp.ne.s32.totalorder %s134, %s135
    %p149 = scmp.eq.s32.totalorder %s17, 1
    %p150 = por %p148, %p149
    %p152 = scmp.ne.s32.totalorder %s135, %s151
    %p153 = scmp.eq.s32.totalorder %s17, 0
    %p154 = por %p152, %p153
    %s155 = ssub.s32 %s18, %s30
    %s156 = ssub.s32 %s19, %s26
    %s157 = sor.u32 %s155, %s156
    %p158 = scmp.eq.s32.totalorder %s157, 0
    %s160 = sadd.s32 %s159, 1
    %s161 = scalar_select %p158, %s159, %s160
    %p164 = pneg %p158
    %p165 = scmp.eq.s32.totalorder %s11, 1
    %p166 = por %p164, %p165
    %p167 = scmp.ne.s32.totalorder %s159, %s162
    %p168 = scmp.eq.s32.totalorder %s11, 0
    %p169 = por %p167, %p168
    %p170 = scmp.ne.s32.totalorder %s159, %s162
    %p171 = scmp.eq.s32.totalorder %s16, 1
    %p172 = por %p170, %p171
    %p173 = scmp.ne.s32.totalorder %s162, %s163
    %p174 = scmp.eq.s32.totalorder %s16, 0
    %p175 = por %p173, %p174
    %p176 = scmp.ne.s32.totalorder %s162, %s163
    %p177 = scmp.eq.s32.totalorder %s17, 1
    %p178 = por %p176, %p177
    %p180 = scmp.ne.s32.totalorder %s163, %s179
    %p181 = scmp.eq.s32.totalorder %s17, 0
    %p182 = por %p180, %p181
    %p183 = scmp.le.s32.totalorder 1, %s11
    %p184 = scmp.lt.s32.totalorder %s11, 3
    %p185 = pnand %p183, %p184
    %p186 = pneg %p185
    // Predicated region
    $region9: #{self_attention_forward.3} parent=5 // pred_check
      _
    $region10: #{self_attention_forward.3} parent=5 // pred_check_branch
      %188 = sbr.rel (%p185) target = $region12
    $region11: #{self_attention_forward.3} parent=5 // pred_region
      %s189 = ssub.s32 %s11, 1
      // Predicated region
      $region13: #{self_attention_forward.3} parent=11 // pred_check
        %p190 = pneg %p70
      $region14: #{self_attention_forward.3} parent=11 // pred_check_branch
        %192 = sbr.rel (%p190) target = $region16
      $region15: #{self_attention_forward.3} parent=11 // pred_region
        _
      $region16: #{self_attention_forward.3} parent=11 // pred_fallthru
        _
      // Predicated region
      $region17: #{self_attention_forward.3} parent=11 // pred_check
        %p193 = pneg %p91
      $region18: #{self_attention_forward.3} parent=11 // pred_check_branch
        %195 = sbr.rel (%p193) target = $region20
      $region19: #{self_attention_forward.3} parent=11 // pred_region
        _
      $region20: #{self_attention_forward.3} parent=11 // pred_fallthru
        _
    $region12: #{self_attention_forward.3} parent=5 // pred_fallthru
      _
    %p196 = scmp.lt.s32.totalorder %s11, 2
    // Predicated region
    $region21: #{self_attention_forward.3} parent=5 // pred_check
      %p197 = pneg %p196
    $region22: #{self_attention_forward.3} parent=5 // pred_check_branch
      %199 = sbr.rel (%p197) target = $region24
    $region23: #{self_attention_forward.3} parent=5 // pred_region
      // Predicated region
      $region25: #{self_attention_forward.3} parent=23 // pred_check
        %p200 = pneg %p43
      $region26: #{self_attention_forward.3} parent=23 // pred_check_branch
        %202 = sbr.rel (%p200) target = $region28
      $region27: #{self_attention_forward.3} parent=23 // pred_region
        %p203 = scmp.lt.s32.totalorder %s18, 1
        %s204 = scalar_select %p203, %s18, 1
        %s205 = smul.addr %s204, 4
        %s206 = scalar_lea.vmem %s0, %s205
      $region28: #{self_attention_forward.3} parent=23 // pred_fallthru
        _
      // Predicated region
      $region29: #{self_attention_forward.3} parent=23 // pred_check
        %p207 = pneg %p113
      $region30: #{self_attention_forward.3} parent=23 // pred_check_branch
        %209 = sbr.rel (%p207) target = $region32
      $region31: #{self_attention_forward.3} parent=23 // pred_region
        %s210 = smul.u32 2, %s19
        %p211 = scmp.lt.s32.totalorder %s18, 1
        %s212 = scalar_select %p211, %s18, 1
        %p213 = scmp.lt.s32.totalorder %s210, 1
        %s214 = scalar_select %p213, %s210, 1
        %s215 = smul.addr %s212, 2
        %s216 = sadd.s32 %s214, %s215
        %s217 = smul.addr %s216, 4
        %s218 = scalar_lea.vmem %s3, %s217
        %s219 = smul.u32 2, %s19
      $region32: #{self_attention_forward.3} parent=23 // pred_fallthru
        _
      // Predicated region
      $region33: #{self_attention_forward.3} parent=23 // pred_check
        %p220 = pneg %p141
      $region34: #{self_attention_forward.3} parent=23 // pred_check_branch
        %222 = sbr.rel (%p220) target = $region36
      $region35: #{self_attention_forward.3} parent=23 // pred_region
        %s223 = smul.u32 2, %s19
        %p224 = scmp.lt.s32.totalorder %s18, 1
        %s225 = scalar_select %p224, %s18, 1
        %p226 = scmp.lt.s32.totalorder %s223, 1
        %s227 = scalar_select %p226, %s223, 1
        %s228 = smul.addr %s225, 2
        %s229 = sadd.s32 %s227, %s228
        %s230 = smul.addr %s229, 4
        %s231 = scalar_lea.vmem %s4, %s230
        %s232 = smul.u32 2, %s19
      $region36: #{self_attention_forward.3} parent=23 // pred_fallthru
        _
    $region24: #{self_attention_forward.3} parent=5 // pred_fallthru
      _
    %p233 = scmp.le.s32.totalorder 1, %s11
    %p234 = scmp.lt.s32.totalorder %s11, 3
    %p235 = pnand %p233, %p234
    %p236 = pneg %p235
    // Predicated region
    $region37: #{self_attention_forward.3} parent=5 // pred_check
      _
    $region38: #{self_attention_forward.3} parent=5 // pred_check_branch
      %238 = sbr.rel (%p235) target = $region40
    $region39: #{self_attention_forward.3} parent=5 // pred_region
      %s239 = ssub.s32 %s11, 1
      %p240 = scmp.lt.s32.totalorder %s20, 1
      %s241 = scalar_select %p240, %s20, 1
      %s242 = smul.addr %s241, 4
      %s243 = scalar_lea.vmem %s0, %s242
      %p244 = pneg %p49
      %p245 = pneg %p46
      %p246 = pneg %p70
      %p247 = pneg %p67
      %p248 = pneg %p91
      %p249 = pneg %p88
      %s250 = smul.u32 2, %s21
      %p251 = scmp.lt.s32.totalorder %s20, 1
      %s252 = scalar_select %p251, %s20, 1
      %p253 = scmp.lt.s32.totalorder %s250, 1
      %s254 = scalar_select %p253, %s250, 1
      %s255 = smul.addr %s252, 2
      %s256 = sadd.s32 %s254, %s255
      %s257 = smul.addr %s256, 4
      %s258 = scalar_lea.vmem %s3, %s257
      %p259 = pneg %p119
      %p260 = pneg %p116
      %s261 = smul.u32 2, %s21
      %p262 = scmp.lt.s32.totalorder %s20, 1
      %s263 = scalar_select %p262, %s20, 1
      %p264 = scmp.lt.s32.totalorder %s261, 1
      %s265 = scalar_select %p264, %s261, 1
      %s266 = smul.addr %s263, 2
      %s267 = sadd.s32 %s265, %s266
      %s268 = smul.addr %s267, 4
      %s269 = scalar_lea.vmem %s4, %s268
      %p270 = pneg %p147
      %p271 = pneg %p144
      %p272 = pneg %p175
      %p273 = pneg %p172
      %s274 = smul.u32 2, %s21
      %p275 = scmp.lt.s32.totalorder %s20, 1
      %s276 = scalar_select %p275, %s20, 1
      %p277 = scmp.lt.s32.totalorder %s274, 1
      %s278 = scalar_select %p277, %s274, 1
      %s279 = smul.addr %s276, 2
      %s280 = sadd.s32 %s278, %s279
      %s281 = smul.addr %s280, 4
      %s282 = scalar_lea.vmem %s5, %s281
      %p283 = scmp.lt.s32.totalorder %s20, 1
      %s284 = scalar_select %p283, %s20, 1
      %s285 = smul.addr %s284, 4
      %s286 = scalar_lea.vmem %s0, %s285
      %s287 = smul.u32 2, %s21
      %p288 = scmp.lt.s32.totalorder %s20, 1
      %s289 = scalar_select %p288, %s20, 1
      %p290 = scmp.lt.s32.totalorder %s287, 1
      %s291 = scalar_select %p290, %s287, 1
      %s292 = smul.addr %s289, 2
      %s293 = sadd.s32 %s291, %s292
      %s294 = smul.addr %s293, 4
      %s295 = scalar_lea.vmem %s3, %s294
      %s296 = smul.u32 2, %s21
      %s297 = smul.u32 2, %s21
      %p298 = scmp.lt.s32.totalorder %s20, 1
      %s299 = scalar_select %p298, %s20, 1
      %p300 = scmp.lt.s32.totalorder %s297, 1
      %s301 = scalar_select %p300, %s297, 1
      %s302 = smul.addr %s299, 2
      %s303 = sadd.s32 %s301, %s302
      %s304 = smul.addr %s303, 4
      %s305 = scalar_lea.vmem %s4, %s304
      %s306 = smul.u32 2, %s21
      %s307 = smul.u32 2, %s21
      %p308 = scmp.lt.s32.totalorder %s20, 1
      %s309 = scalar_select %p308, %s20, 1
      %p310 = scmp.lt.s32.totalorder %s307, 1
      %s311 = scalar_select %p310, %s307, 1
      %s312 = smul.addr %s309, 2
      %s313 = sadd.s32 %s311, %s312
      %s314 = smul.addr %s313, 4
      %s315 = scalar_lea.vmem %s5, %s314
      %s316 = smul.u32 2, %s21
      %v318 = vld [vmem:[%s1] sm:$0x3]
      %v319 = vld [vmem:[%s295] sm:$0xff]
      %v320 = vld [vmem:[%s2] sm:$0xf]
      %322 = vset.pattern.permute.xlu0 0
      %323 = vperm.xlu0 %322, %v320
      %v324 = vpop.permute.xlu0 %323
      %v327 = vunpack.c.l.b16 %v319
      %v328 = vunpack.c.h.b16 %v319
      %v329 = vpack.c.b16 %v327, %v327
      %v330 = vpack.c.b16 %v328, %v328
      %vm331 = vcmask 64512
      %v333 = vsel %vm331, %v318, 0
      %vm335 = vcmask 1043456
      %v337 = vsel %vm335, %v329, 0
      %v340 = vsel %vm335, %v330, 0
      %342 = vmatprep.subr.bf16.mxu0 %v340
      %343 = vmatpush1.bf16.msra.mxu0 %v337
      %344 = vmatprep.subr.bf16.mxu0 0
      %345 = vmatpush1.bf16.msra.mxu0 0
      %346 = vmatprep.subr.bf16.mxu0 0
      %347 = vmatpush1.bf16.msra.mxu0 0
      %348 = vmatprep.subr.bf16.mxu0 0
      %349 = vmatpush1.bf16.msra.mxu0 0
      %350 = vmatprep.subr.bf16.mxu0 0
      %351 = vmatpush1.bf16.msra.mxu0 0
      %352 = vmatprep.subr.bf16.mxu0 0
      %353 = vmatpush1.bf16.msra.mxu0 0
      %354 = vmatprep.subr.bf16.mxu0 0
      %355 = vmatpush1.bf16.msra.mxu0 0
      %356 = vmatprep.subr.bf16.mxu0 0
      %357 = vmatpush1.bf16.msra.mxu0 0
      %358 = vmatprep.subr.bf16.mxu0 0
      %359 = vmatpush1.bf16.msra.mxu0 0
      %360 = vmatprep.subr.bf16.mxu0 0
      %361 = vmatpush1.bf16.msra.mxu0 0
      %362 = vmatprep.subr.bf16.mxu0 0
      %363 = vmatpush1.bf16.msra.mxu0 0
      %364 = vmatprep.subr.bf16.mxu0 0
      %365 = vmatpush1.bf16.msra.mxu0 0
      %366 = vmatprep.subr.bf16.mxu0 0
      %367 = vmatpush1.bf16.msra.mxu0 0
      %368 = vmatprep.subr.bf16.mxu0 0
      %369 = vmatpush1.bf16.msra.mxu0 0
      %370 = vmatprep.subr.bf16.mxu0 0
      %371 = vmatpush1.bf16.msra.mxu0 0
      %372 = vmatprep.subr.bf16.mxu0 0
      %373 = vmatpush1.bf16.msra.mxu0 0
      %374 = vmatprep.mubr.bf16.mxu0 0
      %375 = vmatmul.mubr.bf16.gmra.mrb[0].mxu0 %v333
      %v376 = vpop.f32.mrb[0].mxu0
      %v377 = vadd.f32 %v324, %v376
      %v378 = vpop.f32.mrb[0].mxu0
      %v379 = vadd.f32 %v324, %v378
      %v380 = vpop.f32.mrb[0].mxu0
      %v381 = vpop.f32.mrb[0].mxu0
      %382 = vdwg.mxu0
      %v383 = vld [vmem:[%s286] sm:$0xf]
      %385 = vset.pattern.permute.xlu0 0
      %386 = vperm.xlu0 %385, %v383
      %v387 = vpop.permute.xlu0 %386
      %v389 = vmul.f32 %v387, %v377
      %v390 = vmul.f32 %v387, %v379
      %v391 = vld [vmem:[%s305] sm:$0xff]
      %v393 = vcombine.high %v391, %v391
      %v395 = vadd.f32 %v389, %v391
      %v396 = vadd.f32 %v390, %v393
      %v399 = vcombine.low %v395, %v396
      %401 = vst [vmem:[%s315] sm:$0xff] %v399
      %s402 = smul.u32 2, %s21
      %p403 = scmp.lt.s32.totalorder %s20, 1
      %s404 = scalar_select %p403, %s20, 1
      %p405 = scmp.lt.s32.totalorder %s402, 1
      %s406 = scalar_select %p405, %s402, 1
      %s407 = smul.addr %s404, 2
      %s408 = sadd.s32 %s406, %s407
      %s409 = smul.addr %s408, 4
      %s410 = scalar_lea.vmem %s5, %s409
      // Predicated region
      $region41: #{self_attention_forward.3} parent=39 // pred_check
        %p411 = pneg %p172
      $region42: #{self_attention_forward.3} parent=39 // pred_check_branch
        %413 = sbr.rel (%p411) target = $region44
      $region43: #{self_attention_forward.3} parent=39 // pred_region
        %s414 = smul.u32 2, %s21
      $region44: #{self_attention_forward.3} parent=39 // pred_fallthru
        _
    $region40: #{self_attention_forward.3} parent=5 // pred_fallthru
      _
    %p415 = scmp.le.s32.totalorder 2, %s11
    // Predicated region
    $region45: #{self_attention_forward.3} parent=5 // pred_check
      %p416 = pneg %p415
    $region46: #{self_attention_forward.3} parent=5 // pred_check_branch
      %418 = sbr.rel (%p416) target = $region48
    $region47: #{self_attention_forward.3} parent=5 // pred_region
      %s419 = ssub.s32 %s11, 2
      // Predicated region
      $region49: #{self_attention_forward.3} parent=47 // pred_check
        %p420 = pneg %p178
      $region50: #{self_attention_forward.3} parent=47 // pred_check_branch
        %422 = sbr.rel (%p420) target = $region52
      $region51: #{self_attention_forward.3} parent=47 // pred_region
        %s423 = smul.u32 2, %s23
        %p424 = scmp.lt.s32.totalorder %s22, 1
        %s425 = scalar_select %p424, %s22, 1
        %p426 = scmp.lt.s32.totalorder %s423, 1
        %s427 = scalar_select %p426, %s423, 1
        %s428 = smul.addr %s425, 2
        %s429 = sadd.s32 %s427, %s428
        %s430 = smul.addr %s429, 4
        %s431 = scalar_lea.vmem %s5, %s430
      $region52: #{self_attention_forward.3} parent=47 // pred_fallthru
        _
    $region48: #{self_attention_forward.3} parent=5 // pred_fallthru
      _
  $region6: #{self_attention_forward.3} parent=0 // loop_footer
    %s15 = sadd.s32 1, %s11
  $region7: #{self_attention_forward.3} parent=0 // loop_footer_branch
    %10 = sbr.rel target = $region3
  $region8: #{self_attention_forward.3} parent=0 // loop_exit
    _

// kernel: self_attention_forward.2
$region0: #{self_attention_forward.2}
  #allocation0 [shape = 'u32[]', space=smem, size = 0x4, offset = 0x4, fixed_abs, tag = 'smem constant byte address 0x4 - core index']
  #allocation1 [shape = 'u32[144,128]{1,0:T(1,128)}', space=vmem, size = 0x12000, scoped, tag = 'internal scratch']
  #allocation2 [shape = 'bf16[8,256]{1,0:T(8,128)(2,1)}', space=vmem, size = 0x1000, scoped, tag = 'scratch operand']
  #allocation3 [shape = 'f32[1,256]{1,0:T(1,128)}', space=vmem, size = 0x400, scoped, tag = 'scratch operand']
  #allocation4 [shape = 'f32[1,256]{1,0:T(1,128)}', space=vmem, size = 0x400, scoped, tag = 'scratch operand']
  #allocation5 [shape = 'f32[8,256]{1,0:T(8,128)}', space=vmem, size = 0x2000, scoped, tag = 'scratch operand']
  %s0 = inlined_call_operand.vmem [shape: f32[2,4,256], index: 0, kind: input, shape index: {}, may-alias: {0,1}]
  %s1 = inlined_call_operand.vmem [shape: f32[2,4,256], index: 1, kind: input, shape index: {}, may-alias: {0,1}]
  %s2 = inlined_call_operand.vmem [shape: bf16[16,4], index: 2, kind: input, shape index: {}]
  %s3 = inlined_call_operand.vmem [shape: f32[16,1], index: 3, kind: input, shape index: {}]
  %s4 = inlined_call_operand.vmem [shape: bf16[8,4], index: 4, kind: input, shape index: {}]
  %s5 = inlined_call_operand.vmem [shape: f32[8,1], index: 5, kind: input, shape index: {}]
  %s6 = inlined_call_operand.vmem [shape: bf16[2,8,256], index: 6, kind: output, shape index: {}]
  %s7 = sld [smem:[#allocation0]]
  $region65: #{self_attention_forward.2} parent=0
    _
  %s9 = ssub.s32 1, %s7
  %s10 = scalar_select 0, %s9, %s7
  loop: start=0, step=1, limit=4
  $region2: #{self_attention_forward.2} parent=0 // loop_pre_header
    _
  $region3: #{self_attention_forward.2} parent=0 // loop_header
    %s12 = sphi 0, %s16
    %p13 = scmp.ge.s32.totalorder %s12, 4
    %s19 = sphi 0, %s38
    %s20 = sphi 0, %s34
    %s21 = sphi 0, %s30
    %s22 = sphi 0, %s19
    %s23 = sphi 0, %s20
    %s24 = sphi 0, %s21
    %s25 = sphi 0, %s22
    %s26 = sphi 0, %s23
    %s27 = sphi 0, %s24
    %s43 = sphi 0, %s45
    %s46 = sphi 0, %s43
    %s47 = sphi 0, %s46
    %s63 = sphi 0, %s47
    %s71 = sphi 0, %s73
    %s74 = sphi 0, %s71
    %s75 = sphi 0, %s74
    %s91 = sphi 0, %s75
    %s95 = sphi 0, %s95
    %s97 = sphi 0, %s95
    %s98 = sphi 0, %s97
    %s112 = sphi 0, %s98
    %s116 = sphi 0, %s116
    %s118 = sphi 0, %s116
    %s119 = sphi 0, %s118
    %s133 = sphi 0, %s119
    %s137 = sphi 0, %s137
    %s139 = sphi 0, %s137
    %s140 = sphi 0, %s139
    %s154 = sphi 0, %s140
    %s158 = sphi 0, %s158
    %s160 = sphi 0, %s158
    %s161 = sphi 0, %s160
    %s175 = sphi 0, %s161
    %s183 = sphi 0, %s185
    %s186 = sphi 0, %s183
    %s187 = sphi 0, %s186
    %s203 = sphi 0, %s187
  $region4: #{self_attention_forward.2} parent=0 // loop_header_branch
    %15 = sbr.rel (%p13) target = $region8
  $region5: #{self_attention_forward.2} parent=0 // loop_body
    %s17 = ssub.s32 %s12, 1
    %s18 = ssub.s32 %s12, 2
    %s28 = sadd.s32 1, %s21
    %p29 = scmp.ge.s32.totalorder %s28, 1
    %s30 = scalar_select %p29, 0, %s28
    %s31 = sadd.s32 1, %s20
    %s32 = scalar_select %p29, %s31, %s20
    %p33 = scmp.ge.s32.totalorder %s32, 1
    %s34 = scalar_select %p33, 0, %s32
    %s35 = sadd.s32 1, %s19
    %s36 = scalar_select %p33, %s35, %s19
    %p37 = scmp.ge.s32.totalorder %s36, 2
    %s38 = scalar_select %p37, 0, %s36
    %s39 = ssub.s32 %s19, %s38
    %s40 = ssub.s32 %s20, %s34
    %s41 = sor.u32 %s39, %s40
    %p42 = scmp.eq.s32.totalorder %s41, 0
    %s44 = sadd.s32 %s43, 1
    %s45 = scalar_select %p42, %s43, %s44
    %p48 = pneg %p42
    %p49 = scmp.eq.s32.totalorder %s12, 1
    %p50 = por %p48, %p49
    %p51 = scmp.ne.s32.totalorder %s43, %s46
    %p52 = scmp.eq.s32.totalorder %s12, 0
    %p53 = por %p51, %p52
    %p54 = scmp.ne.s32.totalorder %s43, %s46
    %p55 = scmp.eq.s32.totalorder %s17, 1
    %p56 = por %p54, %p55
    %p57 = scmp.ne.s32.totalorder %s46, %s47
    %p58 = scmp.eq.s32.totalorder %s17, 0
    %p59 = por %p57, %p58
    %p60 = scmp.ne.s32.totalorder %s46, %s47
    %p61 = scmp.eq.s32.totalorder %s18, 1
    %p62 = por %p60, %p61
    %p64 = scmp.ne.s32.totalorder %s47, %s63
    %p65 = scmp.eq.s32.totalorder %s18, 0
    %p66 = por %p64, %p65
    %s67 = ssub.s32 %s19, %s38
    %s68 = ssub.s32 %s21, %s30
    %s69 = sor.u32 %s67, %s68
    %p70 = scmp.eq.s32.totalorder %s69, 0
    %s72 = sadd.s32 %s71, 1
    %s73 = scalar_select %p70, %s71, %s72
    %p76 = pneg %p70
    %p77 = scmp.eq.s32.totalorder %s12, 1
    %p78 = por %p76, %p77
    %p79 = scmp.ne.s32.totalorder %s71, %s74
    %p80 = scmp.eq.s32.totalorder %s12, 0
    %p81 = por %p79, %p80
    %p82 = scmp.ne.s32.totalorder %s71, %s74
    %p83 = scmp.eq.s32.totalorder %s17, 1
    %p84 = por %p82, %p83
    %p85 = scmp.ne.s32.totalorder %s74, %s75
    %p86 = scmp.eq.s32.totalorder %s17, 0
    %p87 = por %p85, %p86
    %p88 = scmp.ne.s32.totalorder %s74, %s75
    %p89 = scmp.eq.s32.totalorder %s18, 1
    %p90 = por %p88, %p89
    %p92 = scmp.ne.s32.totalorder %s75, %s91
    %p93 = scmp.eq.s32.totalorder %s18, 0
    %p94 = por %p92, %p93
    %s96 = sadd.s32 %s95, 1
    %p99 = scmp.eq.s32.totalorder %s12, 1
    %p100 = scmp.ne.s32.totalorder %s95, %s97
    %p101 = scmp.eq.s32.totalorder %s12, 0
    %p102 = por %p100, %p101
    %p103 = scmp.ne.s32.totalorder %s95, %s97
    %p104 = scmp.eq.s32.totalorder %s17, 1
    %p105 = por %p103, %p104
    %p106 = scmp.ne.s32.totalorder %s97, %s98
    %p107 = scmp.eq.s32.totalorder %s17, 0
    %p108 = por %p106, %p107
    %p109 = scmp.ne.s32.totalorder %s97, %s98
    %p110 = scmp.eq.s32.totalorder %s18, 1
    %p111 = por %p109, %p110
    %p113 = scmp.ne.s32.totalorder %s98, %s112
    %p114 = scmp.eq.s32.totalorder %s18, 0
    %p115 = por %p113, %p114
    %s117 = sadd.s32 %s116, 1
    %p120 = scmp.eq.s32.totalorder %s12, 1
    %p121 = scmp.ne.s32.totalorder %s116, %s118
    %p122 = scmp.eq.s32.totalorder %s12, 0
    %p123 = por %p121, %p122
    %p124 = scmp.ne.s32.totalorder %s116, %s118
    %p125 = scmp.eq.s32.totalorder %s17, 1
    %p126 = por %p124, %p125
    %p127 = scmp.ne.s32.totalorder %s118, %s119
    %p128 = scmp.eq.s32.totalorder %s17, 0
    %p129 = por %p127, %p128
    %p130 = scmp.ne.s32.totalorder %s118, %s119
    %p131 = scmp.eq.s32.totalorder %s18, 1
    %p132 = por %p130, %p131
    %p134 = scmp.ne.s32.totalorder %s119, %s133
    %p135 = scmp.eq.s32.totalorder %s18, 0
    %p136 = por %p134, %p135
    %s138 = sadd.s32 %s137, 1
    %p141 = scmp.eq.s32.totalorder %s12, 1
    %p142 = scmp.ne.s32.totalorder %s137, %s139
    %p143 = scmp.eq.s32.totalorder %s12, 0
    %p144 = por %p142, %p143
    %p145 = scmp.ne.s32.totalorder %s137, %s139
    %p146 = scmp.eq.s32.totalorder %s17, 1
    %p147 = por %p145, %p146
    %p148 = scmp.ne.s32.totalorder %s139, %s140
    %p149 = scmp.eq.s32.totalorder %s17, 0
    %p150 = por %p148, %p149
    %p151 = scmp.ne.s32.totalorder %s139, %s140
    %p152 = scmp.eq.s32.totalorder %s18, 1
    %p153 = por %p151, %p152
    %p155 = scmp.ne.s32.totalorder %s140, %s154
    %p156 = scmp.eq.s32.totalorder %s18, 0
    %p157 = por %p155, %p156
    %s159 = sadd.s32 %s158, 1
    %p162 = scmp.eq.s32.totalorder %s12, 1
    %p163 = scmp.ne.s32.totalorder %s158, %s160
    %p164 = scmp.eq.s32.totalorder %s12, 0
    %p165 = por %p163, %p164
    %p166 = scmp.ne.s32.totalorder %s158, %s160
    %p167 = scmp.eq.s32.totalorder %s17, 1
    %p168 = por %p166, %p167
    %p169 = scmp.ne.s32.totalorder %s160, %s161
    %p170 = scmp.eq.s32.totalorder %s17, 0
    %p171 = por %p169, %p170
    %p172 = scmp.ne.s32.totalorder %s160, %s161
    %p173 = scmp.eq.s32.totalorder %s18, 1
    %p174 = por %p172, %p173
    %p176 = scmp.ne.s32.totalorder %s161, %s175
    %p177 = scmp.eq.s32.totalorder %s18, 0
    %p178 = por %p176, %p177
    %s179 = ssub.s32 %s19, %s38
    %s180 = ssub.s32 %s20, %s34
    %s181 = sor.u32 %s179, %s180
    %p182 = scmp.eq.s32.totalorder %s181, 0
    %s184 = sadd.s32 %s183, 1
    %s185 = scalar_select %p182, %s183, %s184
    %p188 = pneg %p182
    %p189 = scmp.eq.s32.totalorder %s12, 1
    %p190 = por %p188, %p189
    %p191 = scmp.ne.s32.totalorder %s183, %s186
    %p192 = scmp.eq.s32.totalorder %s12, 0
    %p193 = por %p191, %p192
    %p194 = scmp.ne.s32.totalorder %s183, %s186
    %p195 = scmp.eq.s32.totalorder %s17, 1
    %p196 = por %p194, %p195
    %p197 = scmp.ne.s32.totalorder %s186, %s187
    %p198 = scmp.eq.s32.totalorder %s17, 0
    %p199 = por %p197, %p198
    %p200 = scmp.ne.s32.totalorder %s186, %s187
    %p201 = scmp.eq.s32.totalorder %s18, 1
    %p202 = por %p200, %p201
    %p204 = scmp.ne.s32.totalorder %s187, %s203
    %p205 = scmp.eq.s32.totalorder %s18, 0
    %p206 = por %p204, %p205
    %p207 = scmp.le.s32.totalorder 1, %s12
    %p208 = scmp.lt.s32.totalorder %s12, 3
    %p209 = pnand %p207, %p208
    %p210 = pneg %p209
    // Predicated region
    $region9: #{self_attention_forward.2} parent=5 // pred_check
      _
    $region10: #{self_attention_forward.2} parent=5 // pred_check_branch
      %212 = sbr.rel (%p209) target = $region12
    $region11: #{self_attention_forward.2} parent=5 // pred_region
      %s213 = ssub.s32 %s12, 1
      // Predicated region
      $region13: #{self_attention_forward.2} parent=11 // pred_check
        %p214 = pneg %p108
      $region14: #{self_attention_forward.2} parent=11 // pred_check_branch
        %216 = sbr.rel (%p214) target = $region16
      $region15: #{self_attention_forward.2} parent=11 // pred_region
        _
      $region16: #{self_attention_forward.2} parent=11 // pred_fallthru
        _
      // Predicated region
      $region17: #{self_attention_forward.2} parent=11 // pred_check
        %p217 = pneg %p129
      $region18: #{self_attention_forward.2} parent=11 // pred_check_branch
        %219 = sbr.rel (%p217) target = $region20
      $region19: #{self_attention_forward.2} parent=11 // pred_region
        _
      $region20: #{self_attention_forward.2} parent=11 // pred_fallthru
        _
      // Predicated region
      $region21: #{self_attention_forward.2} parent=11 // pred_check
        %p220 = pneg %p150
      $region22: #{self_attention_forward.2} parent=11 // pred_check_branch
        %222 = sbr.rel (%p220) target = $region24
      $region23: #{self_attention_forward.2} parent=11 // pred_region
        _
      $region24: #{self_attention_forward.2} parent=11 // pred_fallthru
        _
      // Predicated region
      $region25: #{self_attention_forward.2} parent=11 // pred_check
        %p223 = pneg %p171
      $region26: #{self_attention_forward.2} parent=11 // pred_check_branch
        %225 = sbr.rel (%p223) target = $region28
      $region27: #{self_attention_forward.2} parent=11 // pred_region
        _
      $region28: #{self_attention_forward.2} parent=11 // pred_fallthru
        _
    $region12: #{self_attention_forward.2} parent=5 // pred_fallthru
      _
    %p226 = scmp.lt.s32.totalorder %s12, 2
    // Predicated region
    $region29: #{self_attention_forward.2} parent=5 // pred_check
      %p227 = pneg %p226
    $region30: #{self_attention_forward.2} parent=5 // pred_check_branch
      %229 = sbr.rel (%p227) target = $region32
    $region31: #{self_attention_forward.2} parent=5 // pred_region
      // Predicated region
      $region33: #{self_attention_forward.2} parent=31 // pred_check
        %p230 = pneg %p53
      $region34: #{self_attention_forward.2} parent=31 // pred_check_branch
        %232 = sbr.rel (%p230) target = $region36
      $region35: #{self_attention_forward.2} parent=31 // pred_region
        %s233 = smul.u32 2, %s20
        %p234 = scmp.lt.s32.totalorder %s19, 1
        %s235 = scalar_select %p234, %s19, 1
        %p236 = scmp.lt.s32.totalorder %s233, 1
        %s237 = scalar_select %p236, %s233, 1
        %s238 = smul.addr %s235, 2
        %s239 = sadd.s32 %s237, %s238
        %s240 = smul.addr %s239, 4
        %s241 = scalar_lea.vmem %s0, %s240
        %s242 = smul.u32 2, %s20
      $region36: #{self_attention_forward.2} parent=31 // pred_fallthru
        _
      // Predicated region
      $region37: #{self_attention_forward.2} parent=31 // pred_check
        %p243 = pneg %p81
      $region38: #{self_attention_forward.2} parent=31 // pred_check_branch
        %245 = sbr.rel (%p243) target = $region40
      $region39: #{self_attention_forward.2} parent=31 // pred_region
        %s246 = smul.u32 2, %s21
        %p247 = scmp.lt.s32.totalorder %s19, 1
        %s248 = scalar_select %p247, %s19, 1
        %p249 = scmp.lt.s32.totalorder %s246, 1
        %s250 = scalar_select %p249, %s246, 1
        %s251 = smul.addr %s248, 2
        %s252 = sadd.s32 %s250, %s251
        %s253 = smul.addr %s252, 4
        %s254 = scalar_lea.vmem %s1, %s253
        %s255 = smul.u32 2, %s21
      $region40: #{self_attention_forward.2} parent=31 // pred_fallthru
        _
    $region32: #{self_attention_forward.2} parent=5 // pred_fallthru
      _
    %p256 = scmp.le.s32.totalorder 1, %s12
    %p257 = scmp.lt.s32.totalorder %s12, 3
    %p258 = pnand %p256, %p257
    %p259 = pneg %p258
    // Predicated region
    $region41: #{self_attention_forward.2} parent=5 // pred_check
      _
    $region42: #{self_attention_forward.2} parent=5 // pred_check_branch
      %261 = sbr.rel (%p258) target = $region44
    $region43: #{self_attention_forward.2} parent=5 // pred_region
      %s262 = ssub.s32 %s12, 1
      %s263 = smul.u32 2, %s23
      %p264 = scmp.lt.s32.totalorder %s22, 1
      %s265 = scalar_select %p264, %s22, 1
      %p266 = scmp.lt.s32.totalorder %s263, 1
      %s267 = scalar_select %p266, %s263, 1
      %s268 = smul.addr %s265, 2
      %s269 = sadd.s32 %s267, %s268
      %s270 = smul.addr %s269, 4
      %s271 = scalar_lea.vmem %s0, %s270
      %p272 = pneg %p59
      %p273 = pneg %p56
      %s274 = smul.u32 2, %s24
      %p275 = scmp.lt.s32.totalorder %s22, 1
      %s276 = scalar_select %p275, %s22, 1
      %p277 = scmp.lt.s32.totalorder %s274, 1
      %s278 = scalar_select %p277, %s274, 1
      %s279 = smul.addr %s276, 2
      %s280 = sadd.s32 %s278, %s279
      %s281 = smul.addr %s280, 4
      %s282 = scalar_lea.vmem %s1, %s281
      %p283 = pneg %p87
      %p284 = pneg %p84
      %p285 = pneg %p108
      %p286 = pneg %p105
      %p287 = pneg %p129
      %p288 = pneg %p126
      %p289 = pneg %p150
      %p290 = pneg %p147
      %p291 = pneg %p171
      %p292 = pneg %p168
      %p293 = pneg %p199
      %p294 = pneg %p196
      %s295 = smul.u32 2, %s23
      %p296 = scmp.lt.s32.totalorder %s22, 1
      %s297 = scalar_select %p296, %s22, 1
      %p298 = scmp.lt.s32.totalorder %s295, 1
      %s299 = scalar_select %p298, %s295, 1
      %s300 = smul.addr %s297, 2
      %s301 = sadd.s32 %s299, %s300
      %s302 = smul.addr %s301, 4
      %s303 = scalar_lea.vmem %s6, %s302
      %s304 = smul.u32 2, %s23
      %p305 = scmp.lt.s32.totalorder %s22, 1
      %s306 = scalar_select %p305, %s22, 1
      %p307 = scmp.lt.s32.totalorder %s304, 1
      %s308 = scalar_select %p307, %s304, 1
      %s309 = smul.addr %s306, 2
      %s310 = sadd.s32 %s308, %s309
      %s311 = smul.addr %s310, 4
      %s312 = scalar_lea.vmem %s0, %s311
      %s313 = smul.u32 2, %s23
      %s314 = smul.u32 2, %s24
      %p315 = scmp.lt.s32.totalorder %s22, 1
      %s316 = scalar_select %p315, %s22, 1
      %p317 = scmp.lt.s32.totalorder %s314, 1
      %s318 = scalar_select %p317, %s314, 1
      %s319 = smul.addr %s316, 2
      %s320 = sadd.s32 %s318, %s319
      %s321 = smul.addr %s320, 4
      %s322 = scalar_lea.vmem %s1, %s321
      %s323 = smul.u32 2, %s24
      %s324 = smul.u32 2, %s23
      %p325 = scmp.lt.s32.totalorder %s22, 1
      %s326 = scalar_select %p325, %s22, 1
      %p327 = scmp.lt.s32.totalorder %s324, 1
      %s328 = scalar_select %p327, %s324, 1
      %s329 = smul.addr %s326, 2
      %s330 = sadd.s32 %s328, %s329
      %s331 = smul.addr %s330, 4
      %s332 = scalar_lea.vmem %s6, %s331
      %s333 = smul.u32 2, %s23
      %p335 = scmp.eq.s32.totalorder %s24, 0
      // Predicated region
      $region45: #{self_attention_forward.2} parent=43 // pred_check
        %p336 = pneg %p335
      $region46: #{self_attention_forward.2} parent=43 // pred_check_branch
        %338 = sbr.rel (%p336) target = $region48
      $region47: #{self_attention_forward.2} parent=43 // pred_region
        %v339 = vlaneseq
        %vm340 = vcmp.ge.s32.totalorder %v339, 0
        %vm341 = vcmp.lt.s32.totalorder %v339, 256
        %vm342 = vmand %vm340, %vm341
        %343 = vst.msk [vmem:[#allocation3] sm:$0x3] %vm342, -inf
        %344 = vst.msk [vmem:[#allocation4] sm:$0x3] %vm342, 0.0
        %345 = vst [vmem:[#allocation5] sm:$0xff] 0.0
        %346 = vst [vmem:[#allocation5 + $0x8] sm:$0xff] 0.0
        %v347 = vld [vmem:[%s312] sm:$0xff]
        %v349 = vcombine.high %v347, %v347
        %v351 = vpack.c.bf16 %v347, %v347
        %v352 = vpack.c.bf16 %v349, %v349
        %v353 = vld [vmem:[%s4] sm:$0xf]
        %v354 = vld [vmem:[%s5] sm:$0xff]
        %356 = vset.pattern.permute.xlu0 0
        %357 = vperm.xlu0 %356, %v354
        %v358 = vpop.permute.xlu0 %357
        %vm360 = vcmask 31744
        %v362 = vsel %vm360, %v353, 0
        %vm364 = vcmask 1041408
        %v366 = vsel %vm364, %v351, 0
        %v369 = vsel %vm364, %v352, 0
        %371 = vmatprep.subr.bf16.mxu0 %v369
        %372 = vmatpush1.bf16.msra.mxu0 %v366
        %373 = vmatprep.subr.bf16.mxu0 0
        %374 = vmatpush1.bf16.msra.mxu0 0
        %375 = vmatprep.subr.bf16.mxu0 0
        %376 = vmatpush1.bf16.msra.mxu0 0
        %377 = vmatprep.subr.bf16.mxu0 0
        %378 = vmatpush1.bf16.msra.mxu0 0
        %379 = vmatprep.subr.bf16.mxu0 0
        %380 = vmatpush1.bf16.msra.mxu0 0
        %381 = vmatprep.subr.bf16.mxu0 0
        %382 = vmatpush1.bf16.msra.mxu0 0
        %383 = vmatprep.subr.bf16.mxu0 0
        %384 = vmatpush1.bf16.msra.mxu0 0
        %385 = vmatprep.subr.bf16.mxu0 0
        %386 = vmatpush1.bf16.msra.mxu0 0
        %387 = vmatprep.subr.bf16.mxu0 0
        %388 = vmatpush1.bf16.msra.mxu0 0
        %389 = vmatprep.subr.bf16.mxu0 0
        %390 = vmatpush1.bf16.msra.mxu0 0
        %391 = vmatprep.subr.bf16.mxu0 0
        %392 = vmatpush1.bf16.msra.mxu0 0
        %393 = vmatprep.subr.bf16.mxu0 0
        %394 = vmatpush1.bf16.msra.mxu0 0
        %395 = vmatprep.subr.bf16.mxu0 0
        %396 = vmatpush1.bf16.msra.mxu0 0
        %397 = vmatprep.subr.bf16.mxu0 0
        %398 = vmatpush1.bf16.msra.mxu0 0
        %399 = vmatprep.subr.bf16.mxu0 0
        %400 = vmatpush1.bf16.msra.mxu0 0
        %401 = vmatprep.subr.bf16.mxu0 0
        %402 = vmatpush1.bf16.msra.mxu0 0
        %403 = vmatprep.mubr.bf16.mxu0 0
        %404 = vmatmul.mubr.bf16.gmra.mrb[0].mxu0 %v362
        %v405 = vpop.f32.mrb[0].mxu0
        %v406 = vadd.f32 %v358, %v405
        %v407 = vpop.f32.mrb[0].mxu0
        %v408 = vadd.f32 %v358, %v407
        %v409 = vpop.f32.mrb[0].mxu0
        %v410 = vpop.f32.mrb[0].mxu0
        %411 = vdwg.mxu0
        %v412 = vpack.c.bf16 %v406, %v406
        %v413 = vpack.c.bf16 %v408, %v408
        %v416 = vunpack.c.l.b16 %v412
        %v417 = vunpack.c.l.b16 %v413
        %v418 = vpack.c.b16 %v417, %v416
        %420 = vst [vmem:[#allocation2] sm:$0xff] %v418
      $region48: #{self_attention_forward.2} parent=43 // pred_fallthru
        _
      %v421 = vld [vmem:[%s322] sm:$0xff]
      %v423 = vcombine.high %v421, %v421
      %v425 = vpack.c.bf16 %v421, %v421
      %v426 = vpack.c.bf16 %v423, %v423
      %v427 = vld [vmem:[%s2] sm:$0xf]
      %v428 = vld [vmem:[%s2 + $0x4] sm:$0xf]
      %v429 = vld [vmem:[%s3] sm:$0xff]
      %v430 = vld [vmem:[%s3 + $0x8] sm:$0xff]
      %432 = vset.pattern.permute.xlu0 0
      %433 = vperm.xlu0 %432, %v429
      %v434 = vpop.permute.xlu0 %433
      %437 = vset.pattern.permute.xlu0 0
      %438 = vperm.xlu0 %437, %v430
      %v439 = vpop.permute.xlu0 %438
      %v443 = vunpack.c.l.b16 %v427
      %v444 = vunpack.c.l.b16 %v428
      %v445 = vpack.c.b16 %v444, %v443
      %vm446 = vcmask 31744
      %v448 = vsel %vm446, %v445, 0
      %vm450 = vcmask 1041408
      %v452 = vsel %vm450, %v425, 0
      %v455 = vsel %vm450, %v426, 0
      %457 = vmatprep.subr.bf16.mxu0 %v455
      %458 = vmatpush1.bf16.msra.mxu0 %v452
      %459 = vmatprep.subr.bf16.mxu0 0
      %460 = vmatpush1.bf16.msra.mxu0 0
      %461 = vmatprep.subr.bf16.mxu0 0
      %462 = vmatpush1.bf16.msra.mxu0 0
      %463 = vmatprep.subr.bf16.mxu0 0
      %464 = vmatpush1.bf16.msra.mxu0 0
      %465 = vmatprep.subr.bf16.mxu0 0
      %466 = vmatpush1.bf16.msra.mxu0 0
      %467 = vmatprep.subr.bf16.mxu0 0
      %468 = vmatpush1.bf16.msra.mxu0 0
      %469 = vmatprep.subr.bf16.mxu0 0
      %470 = vmatpush1.bf16.msra.mxu0 0
      %471 = vmatprep.subr.bf16.mxu0 0
      %472 = vmatpush1.bf16.msra.mxu0 0
      %473 = vmatprep.subr.bf16.mxu0 0
      %474 = vmatpush1.bf16.msra.mxu0 0
      %475 = vmatprep.subr.bf16.mxu0 0
      %476 = vmatpush1.bf16.msra.mxu0 0
      %477 = vmatprep.subr.bf16.mxu0 0
      %478 = vmatpush1.bf16.msra.mxu0 0
      %479 = vmatprep.subr.bf16.mxu0 0
      %480 = vmatpush1.bf16.msra.mxu0 0
      %481 = vmatprep.subr.bf16.mxu0 0
      %482 = vmatpush1.bf16.msra.mxu0 0
      %483 = vmatprep.subr.bf16.mxu0 0
      %484 = vmatpush1.bf16.msra.mxu0 0
      %485 = vmatprep.subr.bf16.mxu0 0
      %486 = vmatpush1.bf16.msra.mxu0 0
      %487 = vmatprep.subr.bf16.mxu0 0
      %488 = vmatpush1.bf16.msra.mxu0 0
      %489 = vmatprep.mubr.bf16.mxu0 0
      %490 = vmatmul.mubr.bf16.gmra.mrb[0].mxu0 %v448
      %v491 = vpop.f32.mrb[0].mxu0
      %v492 = vadd.f32 %v434, %v491
      %v493 = vpop.f32.mrb[0].mxu0
      %v494 = vadd.f32 %v434, %v493
      %v495 = vpop.f32.mrb[0].mxu0
      %v496 = vadd.f32 %v439, %v495
      %v497 = vpop.f32.mrb[0].mxu0
      %v498 = vadd.f32 %v439, %v497
      %499 = vdwg.mxu0
      %v500 = vpack.c.bf16 %v492, %v492
      %v501 = vpack.c.bf16 %v494, %v494
      %v502 = vpack.c.bf16 %v496, %v496
      %v503 = vpack.c.bf16 %v498, %v498
      %v504 = vld [vmem:[#allocation2] sm:$0xff]
      %505 = vxpose.xlu0.c.b16.start [1/8] %v500, 128
      %506 = vxpose.xlu0.c.b16.cont [2/8] 0, 128
      %507 = vxpose.xlu0.c.b16.cont [3/8] 0, 128
      %508 = vxpose.xlu0.c.b16.cont [4/8] 0, 128
      %509 = vxpose.xlu0.c.b16.cont [5/8] 0, 128
      %510 = vxpose.xlu0.c.b16.cont [6/8] 0, 128
      %511 = vxpose.xlu0.c.b16.cont [7/8] 0, 128
      %512 = vxpose.xlu0.c.b16.end [8/8] 0, 128
      %v513 = vpop.trf.xlu0
      %v514 = vpop.trf.xlu0
      %v515 = vpop.trf.xlu0
      %v516 = vpop.trf.xlu0
      %v517 = vpop.trf.xlu0
      %v518 = vpop.trf.xlu0
      %v519 = vpop.trf.xlu0
      %v520 = vpop.trf.xlu0
      %521 = vxpose.xlu0.c.b16.start [1/8] %v501, 128
      %522 = vxpose.xlu0.c.b16.cont [2/8] 0, 128
      %523 = vxpose.xlu0.c.b16.cont [3/8] 0, 128
      %524 = vxpose.xlu0.c.b16.cont [4/8] 0, 128
      %525 = vxpose.xlu0.c.b16.cont [5/8] 0, 128
      %526 = vxpose.xlu0.c.b16.cont [6/8] 0, 128
      %527 = vxpose.xlu0.c.b16.cont [7/8] 0, 128
      %528 = vxpose.xlu0.c.b16.end [8/8] 0, 128
      %v529 = vpop.trf.xlu0
      %v530 = vpop.trf.xlu0
      %v531 = vpop.trf.xlu0
      %v532 = vpop.trf.xlu0
      %v533 = vpop.trf.xlu0
      %v534 = vpop.trf.xlu0
      %v535 = vpop.trf.xlu0
      %v536 = vpop.trf.xlu0
      %v538 = vunpack.c.l.b16 %v504
      %v539 = vunpack.c.h.b16 %v504
      %v540 = vpack.c.b16 %v538, %v538
      %v541 = vpack.c.b16 %v539, %v539
      %vm542 = vcmask 64512
      %v544 = vsel %vm542, %v513, 0
      %v547 = vsel %vm542, %v514, 0
      %v550 = vsel %vm542, %v515, 0
      %v553 = vsel %vm542, %v516, 0
      %v556 = vsel %vm542, %v517, 0
      %v559 = vsel %vm542, %v518, 0
      %v562 = vsel %vm542, %v519, 0
      %v565 = vsel %vm542, %v520, 0
      %v568 = vsel %vm542, %v529, 0
      %v571 = vsel %vm542, %v530, 0
      %v574 = vsel %vm542, %v531, 0
      %v577 = vsel %vm542, %v532, 0
      %v580 = vsel %vm542, %v533, 0
      %v583 = vsel %vm542, %v534, 0
      %v586 = vsel %vm542, %v535, 0
      %v589 = vsel %vm542, %v536, 0
      %vm591 = vcmask 1043456
      %v593 = vsel %vm591, %v540, 0
      %v596 = vsel %vm591, %v541, 0
      %598 = vmatprep.subr.bf16.mxu0 %v596
      %599 = vmatpush1.bf16.msra.mxu0 %v593
      %600 = vmatprep.subr.bf16.mxu0 0
      %601 = vmatpush1.bf16.msra.mxu0 0
      %602 = vmatprep.subr.bf16.mxu0 0
      %603 = vmatpush1.bf16.msra.mxu0 0
      %604 = vmatprep.subr.bf16.mxu0 0
      %605 = vmatpush1.bf16.msra.mxu0 0
      %606 = vmatprep.subr.bf16.mxu0 0
      %607 = vmatpush1.bf16.msra.mxu0 0
      %608 = vmatprep.subr.bf16.mxu0 0
      %609 = vmatpush1.bf16.msra.mxu0 0
      %610 = vmatprep.subr.bf16.mxu0 0
      %611 = vmatpush1.bf16.msra.mxu0 0
      %612 = vmatprep.subr.bf16.mxu0 0
      %613 = vmatpush1.bf16.msra.mxu0 0
      %614 = vmatprep.subr.bf16.mxu0 0
      %615 = vmatpush1.bf16.msra.mxu0 0
      %616 = vmatprep.subr.bf16.mxu0 0
      %617 = vmatpush1.bf16.msra.mxu0 0
      %618 = vmatprep.subr.bf16.mxu0 0
      %619 = vmatpush1.bf16.msra.mxu0 0
      %620 = vmatprep.subr.bf16.mxu0 0
      %621 = vmatpush1.bf16.msra.mxu0 0
      %622 = vmatprep.subr.bf16.mxu0 0
      %623 = vmatpush1.bf16.msra.mxu0 0
      %624 = vmatprep.subr.bf16.mxu0 0
      %625 = vmatpush1.bf16.msra.mxu0 0
      %626 = vmatprep.subr.bf16.mxu0 0
      %627 = vmatpush1.bf16.msra.mxu0 0
      %628 = vmatprep.subr.bf16.mxu0 0
      %629 = vmatpush1.bf16.msra.mxu0 0
      %630 = vmatprep.mubr.bf16.mxu0 0
      %631 = vmatmul.mubr.bf16.gmra.mrb[0].mxu0 %v544
      %v632 = vpop.f32.mrb[0].mxu0
      %v633 = vadd.f32 0.0, %v632
      %v634 = vpop.f32.mrb[0].mxu0
      %v635 = vadd.f32 0.0, %v634
      %v636 = vpop.f32.mrb[0].mxu0
      %v637 = vadd.f32 0.0, %v636
      %v638 = vpop.f32.mrb[0].mxu0
      %v639 = vadd.f32 0.0, %v638
      %640 = vmatprep.mubr.bf16.mxu0 0
      %641 = vmatmul.mubr.bf16.gmra.mrb[0].mxu0 %v547
      %v642 = vpop.f32.mrb[0].mxu0
      %v643 = vadd.f32 0.0, %v642
      %v644 = vpop.f32.mrb[0].mxu0
      %v645 = vadd.f32 0.0, %v644
      %v646 = vpop.f32.mrb[0].mxu0
      %v647 = vadd.f32 0.0, %v646
      %v648 = vpop.f32.mrb[0].mxu0
      %v649 = vadd.f32 0.0, %v648
      %650 = vmatprep.mubr.bf16.mxu0 0
      %651 = vmatmul.mubr.bf16.gmra.mrb[0].mxu0 %v550
      %v652 = vpop.f32.mrb[0].mxu0
      %v653 = vadd.f32 0.0, %v652
      %v654 = vpop.f32.mrb[0].mxu0
      %v655 = vadd.f32 0.0, %v654
      %v656 = vpop.f32.mrb[0].mxu0
      %v657 = vadd.f32 0.0, %v656
      %v658 = vpop.f32.mrb[0].mxu0
      %v659 = vadd.f32 0.0, %v658
      %660 = vmatprep.mubr.bf16.mxu0 0
      %661 = vmatmul.mubr.bf16.gmra.mrb[0].mxu0 %v553
      %v662 = vpop.f32.mrb[0].mxu0
      %v663 = vadd.f32 0.0, %v662
      %v664 = vpop.f32.mrb[0].mxu0
      %v665 = vadd.f32 0.0, %v664
      %v666 = vpop.f32.mrb[0].mxu0
      %v667 = vadd.f32 0.0, %v666
      %v668 = vpop.f32.mrb[0].mxu0
      %v669 = vadd.f32 0.0, %v668
      %670 = vmatprep.mubr.bf16.mxu0 0
      %671 = vmatmul.mubr.bf16.gmra.mrb[0].mxu0 %v556
      %v672 = vpop.f32.mrb[0].mxu0
      %v673 = vadd.f32 0.0, %v672
      %v674 = vpop.f32.mrb[0].mxu0
      %v675 = vadd.f32 0.0, %v674
      %v676 = vpop.f32.mrb[0].mxu0
      %v677 = vadd.f32 0.0, %v676
      %v678 = vpop.f32.mrb[0].mxu0
      %v679 = vadd.f32 0.0, %v678
      %680 = vmatprep.mubr.bf16.mxu0 0
      %681 = vmatmul.mubr.bf16.gmra.mrb[0].mxu0 %v559
      %v682 = vpop.f32.mrb[0].mxu0
      %v683 = vadd.f32 0.0, %v682
      %v684 = vpop.f32.mrb[0].mxu0
      %v685 = vadd.f32 0.0, %v684
      %v686 = vpop.f32.mrb[0].mxu0
      %v687 = vadd.f32 0.0, %v686
      %v688 = vpop.f32.mrb[0].mxu0
      %v689 = vadd.f32 0.0, %v688
      %690 = vmatprep.mubr.bf16.mxu0 0
      %691 = vmatmul.mubr.bf16.gmra.mrb[0].mxu0 %v562
      %v692 = vpop.f32.mrb[0].mxu0
      %v693 = vadd.f32 0.0, %v692
      %v694 = vpop.f32.mrb[0].mxu0
      %v695 = vadd.f32 0.0, %v694
      %v696 = vpop.f32.mrb[0].mxu0
      %v697 = vadd.f32 0.0, %v696
      %v698 = vpop.f32.mrb[0].mxu0
      %v699 = vadd.f32 0.0, %v698
      %700 = vmatprep.mubr.bf16.mxu0 0
      %701 = vmatmul.mubr.bf16.gmra.mrb[0].mxu0 %v565
      %v702 = vpop.f32.mrb[0].mxu0
      %v703 = vadd.f32 0.0, %v702
      %v704 = vpop.f32.mrb[0].mxu0
      %v705 = vadd.f32 0.0, %v704
      %v706 = vpop.f32.mrb[0].mxu0
      %v707 = vadd.f32 0.0, %v706
      %v708 = vpop.f32.mrb[0].mxu0
      %v709 = vadd.f32 0.0, %v708
      %710 = vmatprep.mubr.bf16.mxu0 0
      %711 = vmatmul.mubr.bf16.gmra.mrb[0].mxu0 %v568
      %v712 = vpop.f32.mrb[0].mxu0
      %v713 = vadd.f32 0.0, %v712
      %v714 = vpop.f32.mrb[0].mxu0
      %v715 = vadd.f32 0.0, %v714
      %v716 = vpop.f32.mrb[0].mxu0
      %v717 = vadd.f32 0.0, %v716
      %v718 = vpop.f32.mrb[0].mxu0
      %v719 = vadd.f32 0.0, %v718
      %720 = vmatprep.mubr.bf16.mxu0 0
      %721 = vmatmul.mubr.bf16.gmra.mrb[0].mxu0 %v571
      %v722 = vpop.f32.mrb[0].mxu0
      %v723 = vadd.f32 0.0, %v722
      %v724 = vpop.f32.mrb[0].mxu0
      %v725 = vadd.f32 0.0, %v724
      %v726 = vpop.f32.mrb[0].mxu0
      %v727 = vadd.f32 0.0, %v726
      %v728 = vpop.f32.mrb[0].mxu0
      %v729 = vadd.f32 0.0, %v728
      %730 = vmatprep.mubr.bf16.mxu0 0
      %731 = vmatmul.mubr.bf16.gmra.mrb[0].mxu0 %v574
      %v732 = vpop.f32.mrb[0].mxu0
      %v733 = vadd.f32 0.0, %v732
      %v734 = vpop.f32.mrb[0].mxu0
      %v735 = vadd.f32 0.0, %v734
      %v736 = vpop.f32.mrb[0].mxu0
      %v737 = vadd.f32 0.0, %v736
      %v738 = vpop.f32.mrb[0].mxu0
      %v739 = vadd.f32 0.0, %v738
      %740 = vmatprep.mubr.bf16.mxu0 0
      %741 = vmatmul.mubr.bf16.gmra.mrb[0].mxu0 %v577
      %v742 = vpop.f32.mrb[0].mxu0
      %v743 = vadd.f32 0.0, %v742
      %v744 = vpop.f32.mrb[0].mxu0
      %v745 = vadd.f32 0.0, %v744
      %v746 = vpop.f32.mrb[0].mxu0
      %v747 = vadd.f32 0.0, %v746
      %v748 = vpop.f32.mrb[0].mxu0
      %v749 = vadd.f32 0.0, %v748
      %750 = vmatprep.mubr.bf16.mxu0 0
      %751 = vmatmul.mubr.bf16.gmra.mrb[0].mxu0 %v580
      %v752 = vpop.f32.mrb[0].mxu0
      %v753 = vadd.f32 0.0, %v752
      %v754 = vpop.f32.mrb[0].mxu0
      %v755 = vadd.f32 0.0, %v754
      %v756 = vpop.f32.mrb[0].mxu0
      %v757 = vadd.f32 0.0, %v756
      %v758 = vpop.f32.mrb[0].mxu0
      %v759 = vadd.f32 0.0, %v758
      %760 = vmatprep.mubr.bf16.mxu0 0
      %761 = vmatmul.mubr.bf16.gmra.mrb[0].mxu0 %v583
      %v762 = vpop.f32.mrb[0].mxu0
      %v763 = vadd.f32 0.0, %v762
      %v764 = vpop.f32.mrb[0].mxu0
      %v765 = vadd.f32 0.0, %v764
      %v766 = vpop.f32.mrb[0].mxu0
      %v767 = vadd.f32 0.0, %v766
      %v768 = vpop.f32.mrb[0].mxu0
      %v769 = vadd.f32 0.0, %v768
      %770 = vmatprep.mubr.bf16.mxu0 0
      %771 = vmatmul.mubr.bf16.gmra.mrb[0].mxu0 %v586
      %v772 = vpop.f32.mrb[0].mxu0
      %v773 = vadd.f32 0.0, %v772
      %v774 = vpop.f32.mrb[0].mxu0
      %v775 = vadd.f32 0.0, %v774
      %v776 = vpop.f32.mrb[0].mxu0
      %v777 = vadd.f32 0.0, %v776
      %v778 = vpop.f32.mrb[0].mxu0
      %v779 = vadd.f32 0.0, %v778
      %780 = vmatprep.mubr.bf16.mxu0 0
      %781 = vmatmul.mubr.bf16.gmra.mrb[0].mxu0 %v589
      %v782 = vpop.f32.mrb[0].mxu0
      %v783 = vadd.f32 0.0, %v782
      %v784 = vpop.f32.mrb[0].mxu0
      %v785 = vadd.f32 0.0, %v784
      %v786 = vpop.f32.mrb[0].mxu0
      %v787 = vadd.f32 0.0, %v786
      %v788 = vpop.f32.mrb[0].mxu0
      %v789 = vadd.f32 0.0, %v788
      %790 = vdwg.mxu0
      %v791 = vld [vmem:[#allocation3] sm:$0x3]
      %v792 = vmax.f32 %v633, %v643
      %v793 = vmax.f32 %v637, %v647
      %v794 = vmax.f32 %v792, %v653
      %v795 = vmax.f32 %v793, %v657
      %v796 = vmax.f32 %v794, %v663
      %v797 = vmax.f32 %v795, %v667
      %v798 = vmax.f32 %v796, %v673
      %v799 = vmax.f32 %v797, %v677
      %v800 = vmax.f32 %v798, %v683
      %v801 = vmax.f32 %v799, %v687
      %v802 = vmax.f32 %v800, %v693
      %v803 = vmax.f32 %v801, %v697
      %v804 = vmax.f32 %v802, %v703
      %v805 = vmax.f32 %v803, %v707
      %v806 = vmax.f32 %v804, %v713
      %v807 = vmax.f32 %v805, %v717
      %v808 = vmax.f32 %v806, %v723
      %v809 = vmax.f32 %v807, %v727
      %v810 = vmax.f32 %v808, %v733
      %v811 = vmax.f32 %v809, %v737
      %v812 = vmax.f32 %v810, %v743
      %v813 = vmax.f32 %v811, %v747
      %v814 = vmax.f32 %v812, %v753
      %v815 = vmax.f32 %v813, %v757
      %v816 = vmax.f32 %v814, %v763
      %v817 = vmax.f32 %v815, %v767
      %v818 = vmax.f32 %v816, %v773
      %v819 = vmax.f32 %v817, %v777
      %v820 = vmax.f32 %v818, %v783
      %v821 = vmax.f32 %v819, %v787
      %v822 = vmax.f32 %v820, %v821
      %v823 = vrot.slane %v822, 4
      %v824 = vmax.f32 %v822, %v823
      %v825 = vrot.slane %v824, 2
      %v826 = vmax.f32 %v824, %v825
      %v827 = vrot.slane %v826, 1
      %v828 = vmax.f32 %v826, %v827
      %v829 = vmax.f32 %v635, %v645
      %v830 = vmax.f32 %v639, %v649
      %v831 = vmax.f32 %v829, %v655
      %v832 = vmax.f32 %v830, %v659
      %v833 = vmax.f32 %v831, %v665
      %v834 = vmax.f32 %v832, %v669
      %v835 = vmax.f32 %v833, %v675
      %v836 = vmax.f32 %v834, %v679
      %v837 = vmax.f32 %v835, %v685
      %v838 = vmax.f32 %v836, %v689
      %v839 = vmax.f32 %v837, %v695
      %v840 = vmax.f32 %v838, %v699
      %v841 = vmax.f32 %v839, %v705
      %v842 = vmax.f32 %v840, %v709
      %v843 = vmax.f32 %v841, %v715
      %v844 = vmax.f32 %v842, %v719
      %v845 = vmax.f32 %v843, %v725
      %v846 = vmax.f32 %v844, %v729
      %v847 = vmax.f32 %v845, %v735
      %v848 = vmax.f32 %v846, %v739
      %v849 = vmax.f32 %v847, %v745
      %v850 = vmax.f32 %v848, %v749
      %v851 = vmax.f32 %v849, %v755
      %v852 = vmax.f32 %v850, %v759
      %v853 = vmax.f32 %v851, %v765
      %v854 = vmax.f32 %v852, %v769
      %v855 = vmax.f32 %v853, %v775
      %v856 = vmax.f32 %v854, %v779
      %v857 = vmax.f32 %v855, %v785
      %v858 = vmax.f32 %v856, %v789
      %v859 = vmax.f32 %v857, %v858
      %v860 = vrot.slane %v859, 4
      %v861 = vmax.f32 %v859, %v860
      %v862 = vrot.slane %v861, 2
      %v863 = vmax.f32 %v861, %v862
      %v864 = vrot.slane %v863, 1
      %v865 = vmax.f32 %v863, %v864
      %v868 = vcombine.low %v828, %v865
      %v870 = vunpack.c.l.s4 1966171168
      %v871 = vunpack.c.0.s8 %v870
      %v872 = vlaneseq
      %v873 = vshrl.u32 %v872, 7
      %v874 = vsub.s32 %v871, %v873
      %v875 = vrot.slane %v868, %v874
      %v877 = vunpack.c.l.s4 1966171168
      %v878 = vunpack.c.0.s8 %v877
      %v879 = vlaneseq
      %v880 = vshrl.u32 %v879, 7
      %v881 = vsub.s32 %v878, %v880
      %v882 = vrot.slane %v875, %v881
      %v884 = vmax.f32 %v791, %v882
      %v885 = vsub.f32 %v791, %v884
      %v886 = vmul.f32 %v885, 1.442695
      %v887 = vpow.pop %v886
      %v889 = vlaneseq
      %v890 = vshrl.u32 %v889, 7
      %v891 = vsub.s32 0, %v890
      %v892 = vrot.slane %v884, %v891
      %v893 = vlaneseq
      %v894 = vshrl.u32 %v893, 7
      %v895 = vsub.s32 1, %v894
      %v896 = vrot.slane %v884, %v895
      %v899 = vsub.f32 %v633, %v892
      %v900 = vsub.f32 %v635, %v896
      %v901 = vsub.f32 %v637, %v892
      %v902 = vsub.f32 %v639, %v896
      %v903 = vsub.f32 %v643, %v892
      %v904 = vsub.f32 %v645, %v896
      %v905 = vsub.f32 %v647, %v892
      %v906 = vsub.f32 %v649, %v896
      %v907 = vsub.f32 %v653, %v892
      %v908 = vsub.f32 %v655, %v896
      %v909 = vsub.f32 %v657, %v892
      %v910 = vsub.f32 %v659, %v896
      %v911 = vsub.f32 %v663, %v892
      %v912 = vsub.f32 %v665, %v896
      %v913 = vsub.f32 %v667, %v892
      %v914 = vsub.f32 %v669, %v896
      %v915 = vsub.f32 %v673, %v892
      %v916 = vsub.f32 %v675, %v896
      %v917 = vsub.f32 %v677, %v892
      %v918 = vsub.f32 %v679, %v896
      %v919 = vsub.f32 %v683, %v892
      %v920 = vsub.f32 %v685, %v896
      %v921 = vsub.f32 %v687, %v892
      %v922 = vsub.f32 %v689, %v896
      %v923 = vsub.f32 %v693, %v892
      %v924 = vsub.f32 %v695, %v896
      %v925 = vsub.f32 %v697, %v892
      %v926 = vsub.f32 %v699, %v896
      %v927 = vsub.f32 %v703, %v892
      %v928 = vsub.f32 %v705, %v896
      %v929 = vsub.f32 %v707, %v892
      %v930 = vsub.f32 %v709, %v896
      %v931 = vsub.f32 %v713, %v892
      %v932 = vsub.f32 %v715, %v896
      %v933 = vsub.f32 %v717, %v892
      %v934 = vsub.f32 %v719, %v896
      %v935 = vsub.f32 %v723, %v892
      %v936 = vsub.f32 %v725, %v896
      %v937 = vsub.f32 %v727, %v892
      %v938 = vsub.f32 %v729, %v896
      %v939 = vsub.f32 %v733, %v892
      %v940 = vsub.f32 %v735, %v896
      %v941 = vsub.f32 %v737, %v892
      %v942 = vsub.f32 %v739, %v896
      %v943 = vsub.f32 %v743, %v892
      %v944 = vsub.f32 %v745, %v896
      %v945 = vsub.f32 %v747, %v892
      %v946 = vsub.f32 %v749, %v896
      %v947 = vsub.f32 %v753, %v892
      %v948 = vsub.f32 %v755, %v896
      %v949 = vsub.f32 %v757, %v892
      %v950 = vsub.f32 %v759, %v896
      %v951 = vsub.f32 %v763, %v892
      %v952 = vsub.f32 %v765, %v896
      %v953 = vsub.f32 %v767, %v892
      %v954 = vsub.f32 %v769, %v896
      %v955 = vsub.f32 %v773, %v892
      %v956 = vsub.f32 %v775, %v896
      %v957 = vsub.f32 %v777, %v892
      %v958 = vsub.f32 %v779, %v896
      %v959 = vsub.f32 %v783, %v892
      %v960 = vsub.f32 %v785, %v896
      %v961 = vsub.f32 %v787, %v892
      %v962 = vsub.f32 %v789, %v896
      %v963 = vmul.f32 %v899, 1.442695
      %v964 = vpow.pop %v963
      %v965 = vmul.f32 %v900, 1.442695
      %v966 = vpow.pop %v965
      %v967 = vmul.f32 %v901, 1.442695
      %v968 = vpow.pop %v967
      %v969 = vmul.f32 %v902, 1.442695
      %v970 = vpow.pop %v969
      %v971 = vmul.f32 %v903, 1.442695
      %v972 = vpow.pop %v971
      %v973 = vmul.f32 %v904, 1.442695
      %v974 = vpow.pop %v973
      %v975 = vmul.f32 %v905, 1.442695
      %v976 = vpow.pop %v975
      %v977 = vmul.f32 %v906, 1.442695
      %v978 = vpow.pop %v977
      %v979 = vmul.f32 %v907, 1.442695
      %v980 = vpow.pop %v979
      %v981 = vmul.f32 %v908, 1.442695
      %v982 = vpow.pop %v981
      %v983 = vmul.f32 %v909, 1.442695
      %v984 = vpow.pop %v983
      %v985 = vmul.f32 %v910, 1.442695
      %v986 = vpow.pop %v985
      %v987 = vmul.f32 %v911, 1.442695
      %v988 = vpow.pop %v987
      %v989 = vmul.f32 %v912, 1.442695
      %v990 = vpow.pop %v989
      %v991 = vmul.f32 %v913, 1.442695
      %v992 = vpow.pop %v991
      %v993 = vmul.f32 %v914, 1.442695
      %v994 = vpow.pop %v993
      %v995 = vmul.f32 %v915, 1.442695
      %v996 = vpow.pop %v995
      %v997 = vmul.f32 %v916, 1.442695
      %v998 = vpow.pop %v997
      %v999 = vmul.f32 %v917, 1.442695
      %v1000 = vpow.pop %v999
      %v1001 = vmul.f32 %v918, 1.442695
      %v1002 = vpow.pop %v1001
      %v1003 = vmul.f32 %v919, 1.442695
      %v1004 = vpow.pop %v1003
      %v1005 = vmul.f32 %v920, 1.442695
      %v1006 = vpow.pop %v1005
      %v1007 = vmul.f32 %v921, 1.442695
      %v1008 = vpow.pop %v1007
      %v1009 = vmul.f32 %v922, 1.442695
      %v1010 = vpow.pop %v1009
      %v1011 = vmul.f32 %v923, 1.442695
      %v1012 = vpow.pop %v1011
      %v1013 = vmul.f32 %v924, 1.442695
      %v1014 = vpow.pop %v1013
      %v1015 = vmul.f32 %v925, 1.442695
      %v1016 = vpow.pop %v1015
      %v1017 = vmul.f32 %v926, 1.442695
      %v1018 = vpow.pop %v1017
      %v1019 = vmul.f32 %v927, 1.442695
      %v1020 = vpow.pop %v1019
      %v1021 = vmul.f32 %v928, 1.442695
      %v1022 = vpow.pop %v1021
      %v1023 = vmul.f32 %v929, 1.442695
      %v1024 = vpow.pop %v1023
      %v1025 = vmul.f32 %v930, 1.442695
      %v1026 = vpow.pop %v1025
      %v1027 = vmul.f32 %v931, 1.442695
      %v1028 = vpow.pop %v1027
      %v1029 = vmul.f32 %v932, 1.442695
      %v1030 = vpow.pop %v1029
      %v1031 = vmul.f32 %v933, 1.442695
      %v1032 = vpow.pop %v1031
      %v1033 = vmul.f32 %v934, 1.442695
      %v1034 = vpow.pop %v1033
      %v1035 = vmul.f32 %v935, 1.442695
      %v1036 = vpow.pop %v1035
      %v1037 = vmul.f32 %v936, 1.442695
      %v1038 = vpow.pop %v1037
      %v1039 = vmul.f32 %v937, 1.442695
      %v1040 = vpow.pop %v1039
      %v1041 = vmul.f32 %v938, 1.442695
      %v1042 = vpow.pop %v1041
      %v1043 = vmul.f32 %v939, 1.442695
      %v1044 = vpow.pop %v1043
      %v1045 = vmul.f32 %v940, 1.442695
      %v1046 = vpow.pop %v1045
      %v1047 = vmul.f32 %v941, 1.442695
      %v1048 = vpow.pop %v1047
      %v1049 = vmul.f32 %v942, 1.442695
      %v1050 = vpow.pop %v1049
      %v1051 = vmul.f32 %v943, 1.442695
      %v1052 = vpow.pop %v1051
      %v1053 = vmul.f32 %v944, 1.442695
      %v1054 = vpow.pop %v1053
      %v1055 = vmul.f32 %v945, 1.442695
      %v1056 = vpow.pop %v1055
      %v1057 = vmul.f32 %v946, 1.442695
      %v1058 = vpow.pop %v1057
      %v1059 = vmul.f32 %v947, 1.442695
      %v1060 = vpow.pop %v1059
      %v1061 = vmul.f32 %v948, 1.442695
      %v1062 = vpow.pop %v1061
      %v1063 = vmul.f32 %v949, 1.442695
      %v1064 = vpow.pop %v1063
      %v1065 = vmul.f32 %v950, 1.442695
      %v1066 = vpow.pop %v1065
      %v1067 = vmul.f32 %v951, 1.442695
      %v1068 = vpow.pop %v1067
      %v1069 = vmul.f32 %v952, 1.442695
      %v1070 = vpow.pop %v1069
      %v1071 = vmul.f32 %v953, 1.442695
      %v1072 = vpow.pop %v1071
      %v1073 = vmul.f32 %v954, 1.442695
      %v1074 = vpow.pop %v1073
      %v1075 = vmul.f32 %v955, 1.442695
      %v1076 = vpow.pop %v1075
      %v1077 = vmul.f32 %v956, 1.442695
      %v1078 = vpow.pop %v1077
      %v1079 = vmul.f32 %v957, 1.442695
      %v1080 = vpow.pop %v1079
      %v1081 = vmul.f32 %v958, 1.442695
      %v1082 = vpow.pop %v1081
      %v1083 = vmul.f32 %v959, 1.442695
      %v1084 = vpow.pop %v1083
      %v1085 = vmul.f32 %v960, 1.442695
      %v1086 = vpow.pop %v1085
      %v1087 = vmul.f32 %v961, 1.442695
      %v1088 = vpow.pop %v1087
      %v1089 = vmul.f32 %v962, 1.442695
      %v1090 = vpow.pop %v1089
      %v1091 = vld [vmem:[#allocation4] sm:$0x3]
      %v1092 = vmul.f32 %v887, %v1091
      %v1093 = vadd.f32 %v964, %v968
      %v1094 = vadd.f32 %v1093, %v972
      %v1095 = vadd.f32 %v1094, %v976
      %v1096 = vadd.f32 %v1095, %v980
      %v1097 = vadd.f32 %v1096, %v984
      %v1098 = vadd.f32 %v1097, %v988
      %v1099 = vadd.f32 %v1098, %v992
      %v1100 = vadd.f32 %v1099, %v996
      %v1101 = vadd.f32 %v1100, %v1000
      %v1102 = vadd.f32 %v1101, %v1004
      %v1103 = vadd.f32 %v1102, %v1008
      %v1104 = vadd.f32 %v1103, %v1012
      %v1105 = vadd.f32 %v1104, %v1016
      %v1106 = vadd.f32 %v1105, %v1020
      %v1107 = vadd.f32 %v1106, %v1024
      %v1108 = vadd.f32 %v1107, %v1028
      %v1109 = vadd.f32 %v1108, %v1032
      %v1110 = vadd.f32 %v1109, %v1036
      %v1111 = vadd.f32 %v1110, %v1040
      %v1112 = vadd.f32 %v1111, %v1044
      %v1113 = vadd.f32 %v1112, %v1048
      %v1114 = vadd.f32 %v1113, %v1052
      %v1115 = vadd.f32 %v1114, %v1056
      %v1116 = vadd.f32 %v1115, %v1060
      %v1117 = vadd.f32 %v1116, %v1064
      %v1118 = vadd.f32 %v1117, %v1068
      %v1119 = vadd.f32 %v1118, %v1072
      %v1120 = vadd.f32 %v1119, %v1076
      %v1121 = vadd.f32 %v1120, %v1080
      %v1122 = vadd.f32 %v1121, %v1084
      %v1123 = vadd.f32 %v1122, %v1088
      %v1124 = vrot.slane %v1123, 4
      %v1125 = vadd.f32 %v1123, %v1124
      %v1126 = vrot.slane %v1125, 2
      %v1127 = vadd.f32 %v1125, %v1126
      %v1128 = vrot.slane %v1127, 1
      %v1129 = vadd.f32 %v1127, %v1128
      %v1130 = vadd.f32 %v966, %v970
      %v1131 = vadd.f32 %v1130, %v974
      %v1132 = vadd.f32 %v1131, %v978
      %v1133 = vadd.f32 %v1132, %v982
      %v1134 = vadd.f32 %v1133, %v986
      %v1135 = vadd.f32 %v1134, %v990
      %v1136 = vadd.f32 %v1135, %v994
      %v1137 = vadd.f32 %v1136, %v998
      %v1138 = vadd.f32 %v1137, %v1002
      %v1139 = vadd.f32 %v1138, %v1006
      %v1140 = vadd.f32 %v1139, %v1010
      %v1141 = vadd.f32 %v1140, %v1014
      %v1142 = vadd.f32 %v1141, %v1018
      %v1143 = vadd.f32 %v1142, %v1022
      %v1144 = vadd.f32 %v1143, %v1026
      %v1145 = vadd.f32 %v1144, %v1030
      %v1146 = vadd.f32 %v1145, %v1034
      %v1147 = vadd.f32 %v1146, %v1038
      %v1148 = vadd.f32 %v1147, %v1042
      %v1149 = vadd.f32 %v1148, %v1046
      %v1150 = vadd.f32 %v1149, %v1050
      %v1151 = vadd.f32 %v1150, %v1054
      %v1152 = vadd.f32 %v1151, %v1058
      %v1153 = vadd.f32 %v1152, %v1062
      %v1154 = vadd.f32 %v1153, %v1066
      %v1155 = vadd.f32 %v1154, %v1070
      %v1156 = vadd.f32 %v1155, %v1074
      %v1157 = vadd.f32 %v1156, %v1078
      %v1158 = vadd.f32 %v1157, %v1082
      %v1159 = vadd.f32 %v1158, %v1086
      %v1160 = vadd.f32 %v1159, %v1090
      %v1161 = vrot.slane %v1160, 4
      %v1162 = vadd.f32 %v1160, %v1161
      %v1163 = vrot.slane %v1162, 2
      %v1164 = vadd.f32 %v1162, %v1163
      %v1165 = vrot.slane %v1164, 1
      %v1166 = vadd.f32 %v1164, %v1165
      %v1169 = vcombine.low %v1129, %v1166
      %v1171 = vunpack.c.l.s4 1966171168
      %v1172 = vunpack.c.0.s8 %v1171
      %v1173 = vlaneseq
      %v1174 = vshrl.u32 %v1173, 7
      %v1175 = vsub.s32 %v1172, %v1174
      %v1176 = vrot.slane %v1169, %v1175
      %v1178 = vunpack.c.l.s4 1966171168
      %v1179 = vunpack.c.0.s8 %v1178
      %v1180 = vlaneseq
      %v1181 = vshrl.u32 %v1180, 7
      %v1182 = vsub.s32 %v1179, %v1181
      %v1183 = vrot.slane %v1176, %v1182
      %v1185 = vadd.f32 %v1092, %v1183
      %v1186 = vlaneseq
      %vm1187 = vcmp.ge.s32.totalorder %v1186, 0
      %vm1188 = vcmp.lt.s32.totalorder %v1186, 256
      %vm1189 = vmand %vm1187, %vm1188
      %1190 = vst.msk [vmem:[#allocation4] sm:$0x3] %vm1189, %v1185
      %v1191 = vld [vmem:[#allocation5] sm:$0xff]
      %v1192 = vld [vmem:[#allocation5 + $0x8] sm:$0xff]
      %v1194 = vlaneseq
      %v1195 = vshrl.u32 %v1194, 7
      %v1196 = vsub.s32 0, %v1195
      %v1197 = vrot.slane %v887, %v1196
      %v1198 = vlaneseq
      %v1199 = vshrl.u32 %v1198, 7
      %v1200 = vsub.s32 1, %v1199
      %v1201 = vrot.slane %v887, %v1200
      %v1204 = vmul.f32 %v1197, %v1191
      %v1205 = vmul.f32 %v1201, %v1192
      %v1206 = vpack.c.bf16 %v968, %v964
      %v1207 = vpack.c.bf16 %v970, %v966
      %v1208 = vpack.c.bf16 %v976, %v972
      %v1209 = vpack.c.bf16 %v978, %v974
      %v1210 = vpack.c.bf16 %v984, %v980
      %v1211 = vpack.c.bf16 %v986, %v982
      %v1212 = vpack.c.bf16 %v992, %v988
      %v1213 = vpack.c.bf16 %v994, %v990
      %v1214 = vpack.c.bf16 %v1000, %v996
      %v1215 = vpack.c.bf16 %v1002, %v998
      %v1216 = vpack.c.bf16 %v1008, %v1004
      %v1217 = vpack.c.bf16 %v1010, %v1006
      %v1218 = vpack.c.bf16 %v1016, %v1012
      %v1219 = vpack.c.bf16 %v1018, %v1014
      %v1220 = vpack.c.bf16 %v1024, %v1020
      %v1221 = vpack.c.bf16 %v1026, %v1022
      %v1222 = vpack.c.bf16 %v1032, %v1028
      %v1223 = vpack.c.bf16 %v1034, %v1030
      %v1224 = vpack.c.bf16 %v1040, %v1036
      %v1225 = vpack.c.bf16 %v1042, %v1038
      %v1226 = vpack.c.bf16 %v1048, %v1044
      %v1227 = vpack.c.bf16 %v1050, %v1046
      %v1228 = vpack.c.bf16 %v1056, %v1052
      %v1229 = vpack.c.bf16 %v1058, %v1054
      %v1230 = vpack.c.bf16 %v1064, %v1060
      %v1231 = vpack.c.bf16 %v1066, %v1062
      %v1232 = vpack.c.bf16 %v1072, %v1068
      %v1233 = vpack.c.bf16 %v1074, %v1070
      %v1234 = vpack.c.bf16 %v1080, %v1076
      %v1235 = vpack.c.bf16 %v1082, %v1078
      %v1236 = vpack.c.bf16 %v1088, %v1084
      %v1237 = vpack.c.bf16 %v1090, %v1086
      %1238 = vmatprep.subr.bf16.mxu0 %v1207
      %1239 = vmatpush1.bf16.msra.mxu0 %v1206
      %1240 = vmatprep.subr.bf16.mxu0 %v1209
      %1241 = vmatpush1.bf16.msra.mxu0 %v1208
      %1242 = vmatprep.subr.bf16.mxu0 %v1211
      %1243 = vmatpush1.bf16.msra.mxu0 %v1210
      %1244 = vmatprep.subr.bf16.mxu0 %v1213
      %1245 = vmatpush1.bf16.msra.mxu0 %v1212
      %1246 = vmatprep.subr.bf16.mxu0 %v1215
      %1247 = vmatpush1.bf16.msra.mxu0 %v1214
      %1248 = vmatprep.subr.bf16.mxu0 %v1217
      %1249 = vmatpush1.bf16.msra.mxu0 %v1216
      %1250 = vmatprep.subr.bf16.mxu0 %v1219
      %1251 = vmatpush1.bf16.msra.mxu0 %v1218
      %1252 = vmatprep.subr.bf16.mxu0 %v1221
      %1253 = vmatpush1.bf16.msra.mxu0 %v1220
      %1254 = vmatprep.subr.bf16.mxu0 %v1223
      %1255 = vmatpush1.bf16.msra.mxu0 %v1222
      %1256 = vmatprep.subr.bf16.mxu0 %v1225
      %1257 = vmatpush1.bf16.msra.mxu0 %v1224
      %1258 = vmatprep.subr.bf16.mxu0 %v1227
      %1259 = vmatpush1.bf16.msra.mxu0 %v1226
      %1260 = vmatprep.subr.bf16.mxu0 %v1229
      %1261 = vmatpush1.bf16.msra.mxu0 %v1228
      %1262 = vmatprep.subr.bf16.mxu0 %v1231
      %1263 = vmatpush1.bf16.msra.mxu0 %v1230
      %1264 = vmatprep.subr.bf16.mxu0 %v1233
      %1265 = vmatpush1.bf16.msra.mxu0 %v1232
      %1266 = vmatprep.subr.bf16.mxu0 %v1235
      %1267 = vmatpush1.bf16.msra.mxu0 %v1234
      %1268 = vmatprep.subr.bf16.mxu0 %v1237
      %1269 = vmatpush1.bf16.msra.mxu0 %v1236
      %1270 = vmatprep.mubr.bf16.mxu0 %v503
      %1271 = vmatmul.mubr.bf16.gmra.mrb[0].mxu0 %v502
      %v1272 = vpop.f32.mrb[0].mxu0
      %v1273 = vadd.f32 0.0, %v1272
      %v1274 = vpop.f32.mrb[0].mxu0
      %v1275 = vadd.f32 0.0, %v1274
      %v1276 = vpop.f32.mrb[0].mxu0
      %v1277 = vpop.f32.mrb[0].mxu0
      %1278 = vdwg.mxu0
      %v1279 = vadd.f32 %v1204, %v1273
      %v1280 = vadd.f32 %v1205, %v1275
      %1281 = vst [vmem:[#allocation5] sm:$0xff] %v1279
      %1282 = vst [vmem:[#allocation5 + $0x8] sm:$0xff] %v1280
      %1283 = vst.msk [vmem:[#allocation3] sm:$0x3] %vm1189, %v884
      // Predicated region
      $region49: #{self_attention_forward.2} parent=43 // pred_check
        %p1284 = pneg %p335
      $region50: #{self_attention_forward.2} parent=43 // pred_check_branch
        %1286 = sbr.rel (%p1284) target = $region52
      $region51: #{self_attention_forward.2} parent=43 // pred_region
        %v1287 = vld [vmem:[#allocation5] sm:$0xff]
        %v1288 = vld [vmem:[#allocation5 + $0x8] sm:$0xff]
        %v1289 = vld [vmem:[#allocation4] sm:$0x3]
        %v1290 = vrcp.pop %v1289
        %v1292 = vlaneseq
        %v1293 = vshrl.u32 %v1292, 7
        %v1294 = vsub.s32 0, %v1293
        %v1295 = vrot.slane %v1290, %v1294
        %v1296 = vlaneseq
        %v1297 = vshrl.u32 %v1296, 7
        %v1298 = vsub.s32 1, %v1297
        %v1299 = vrot.slane %v1290, %v1298
        %v1302 = vmul.f32 %v1287, %v1295
        %v1303 = vmul.f32 %v1288, %v1299
        %v1304 = vpack.c.bf16 %v1302, %v1302
        %v1305 = vpack.c.bf16 %v1303, %v1303
        %v1308 = vunpack.c.l.b16 %v1304
        %v1309 = vunpack.c.l.b16 %v1305
        %v1310 = vpack.c.b16 %v1309, %v1308
        %1312 = vst [vmem:[%s332] sm:$0xff] %v1310
      $region52: #{self_attention_forward.2} parent=43 // pred_fallthru
        _
      %s1313 = smul.u32 2, %s23
      %p1314 = scmp.lt.s32.totalorder %s22, 1
      %s1315 = scalar_select %p1314, %s22, 1
      %p1316 = scmp.lt.s32.totalorder %s1313, 1
      %s1317 = scalar_select %p1316, %s1313, 1
      %s1318 = smul.addr %s1315, 2
      %s1319 = sadd.s32 %s1317, %s1318
      %s1320 = smul.addr %s1319, 4
      %s1321 = scalar_lea.vmem %s6, %s1320
      // Predicated region
      $region53: #{self_attention_forward.2} parent=43 // pred_check
        %p1322 = pneg %p196
      $region54: #{self_attention_forward.2} parent=43 // pred_check_branch
        %1324 = sbr.rel (%p1322) target = $region56
      $region55: #{self_attention_forward.2} parent=43 // pred_region
        %s1325 = smul.u32 2, %s23
      $region56: #{self_attention_forward.2} parent=43 // pred_fallthru
        _
    $region44: #{self_attention_forward.2} parent=5 // pred_fallthru
      _
    %p1326 = scmp.le.s32.totalorder 2, %s12
    // Predicated region
    $region57: #{self_attention_forward.2} parent=5 // pred_check
      %p1327 = pneg %p1326
    $region58: #{self_attention_forward.2} parent=5 // pred_check_branch
      %1329 = sbr.rel (%p1327) target = $region60
    $region59: #{self_attention_forward.2} parent=5 // pred_region
      %s1330 = ssub.s32 %s12, 2
      // Predicated region
      $region61: #{self_attention_forward.2} parent=59 // pred_check
        %p1331 = pneg %p202
      $region62: #{self_attention_forward.2} parent=59 // pred_check_branch
        %1333 = sbr.rel (%p1331) target = $region64
      $region63: #{self_attention_forward.2} parent=59 // pred_region
        %s1334 = smul.u32 2, %s26
        %p1335 = scmp.lt.s32.totalorder %s25, 1
        %s1336 = scalar_select %p1335, %s25, 1
        %p1337 = scmp.lt.s32.totalorder %s1334, 1
        %s1338 = scalar_select %p1337, %s1334, 1
        %s1339 = smul.addr %s1336, 2
        %s1340 = sadd.s32 %s1338, %s1339
        %s1341 = smul.addr %s1340, 4
        %s1342 = scalar_lea.vmem %s6, %s1341
      $region64: #{self_attention_forward.2} parent=59 // pred_fallthru
        _
    $region60: #{self_attention_forward.2} parent=5 // pred_fallthru
      _
  $region6: #{self_attention_forward.2} parent=0 // loop_footer
    %s16 = sadd.s32 1, %s12
  $region7: #{self_attention_forward.2} parent=0 // loop_footer_branch
    %11 = sbr.rel target = $region3
  $region8: #{self_attention_forward.2} parent=0 // loop_exit
    _

</llo_original>
